<compile_context>
chip_gen: v7x
topology: tpu7x:2x2x1
jax: 0.10.0
libtpu: 0.0.40
codegen_flags: <defaults>
</compile_context>

<pallas_src>
import functools

import jax
import jax.numpy as jnp
from jax import lax
from jax.experimental import pallas as pl
from jax.experimental.pallas import tpu as pltpu


NEG_BIG = -1e30  # bias for padded vocab columns (kills them in the softmax)


def _round_up(x, m):
    return (x + m - 1) // m * m


def cbow_fused_kernel(ids_ref, emb_hbm, w_ref, b_ref, out_ref,
                      rows_sc, embeds_sc, m_sc, l_sc, dma_sem):
    j = pl.program_id(0)
    nj = pl.num_programs(0)
    B, C = ids_ref.shape             # static (SMEM scalar-prefetch ref)
    B_pad, E = embeds_sc.shape
    TV = w_ref.shape[0]

    # ---- grid step 0: DMA-gather the B*C embedding rows straight from HBM ----
    @pl.when(j == 0)
    def _gather_and_init():
        m_sc[...] = jnp.full_like(m_sc, -jnp.inf)
        l_sc[...] = jnp.zeros_like(l_sc)

        copies = []
        for b in range(B):
            for c in range(C):
                tok = ids_ref[b, c]
                cp = pltpu.make_async_copy(
                    emb_hbm.at[pl.ds(tok, 1), :],     # one (1, E) row in HBM
                    rows_sc.at[c, b:b + 1, :],        # its (1, E) landing slot
                    dma_sem)
                cp.start()
                copies.append(cp)
        for cp in copies:
            cp.wait()

        if B_pad > B:  # padded batch rows contribute zero embeddings
            rows_sc[:, B:, :] = jnp.zeros((C, B_pad - B, E), rows_sc.dtype)

        # Context sum in f32, single dense bf16 store (cast happens once).
        embeds_sc[...] = jnp.sum(rows_sc[...], axis=0).astype(embeds_sc.dtype)

    # ---- every step: (B_pad, E) x (TV, E)^T on the MXU + online logsumexp ----
    logits = lax.dot_general(
        embeds_sc[...], w_ref[...],
        dimension_numbers=(((1,), (1,)), ((), ())),   # contract on E (natural layout)
        preferred_element_type=jnp.float32)
    logits = logits + b_ref[...]

    col = pl.multiple_of(j * TV, TV)
    out_ref[:, pl.ds(col, TV)] = logits               # raw logits, VMEM-resident output

    m_prev = m_sc[...]
    m_new = jnp.maximum(m_prev, jnp.max(logits, axis=-1, keepdims=True))
    l_sc[...] = (l_sc[...] * jnp.exp(m_prev - m_new)
                 + jnp.sum(jnp.exp(logits - m_new), axis=-1, keepdims=True))
    m_sc[...] = m_new

    # ---- last step: fused log-softmax finalize (no second kernel / HBM trip) ----
    @pl.when(j == nj - 1)
    def _finalize():
        lse = m_sc[...] + jnp.log(l_sc[...])
        out_ref[...] = out_ref[...] - lse


def cbow_prepare_params(emb_table, weight, bias, *, tv=2048):
    """One-time parameter glue, hoisted out of the per-call hot path.

    Returns (emb_f32, w_padded_bf16 (V_pad, E), bias_padded_f32 (1, V_pad), TV, V).
    """
    V, E = emb_table.shape
    TV = min(_round_up(tv, 128), _round_up(V, 128))   # lane-dense vocab tile
    V_pad = _round_up(V, TV)
    w_pad = jnp.zeros((V_pad, E), jnp.bfloat16).at[:V].set(
        weight.astype(jnp.bfloat16))
    b_pad = jnp.full((1, V_pad), NEG_BIG, jnp.float32).at[:, :V].set(
        bias.reshape(1, V).astype(jnp.float32))
    return emb_table.astype(jnp.float32), w_pad, b_pad, TV, V


@functools.partial(jax.jit, static_argnames=("tv", "vocab_size"))
def cbow_forward(token_ids, emb_table, w_pad, b_pad, *, tv, vocab_size):
    """token_ids: (B, C) int32; emb_table: (V, E) f32 (HBM-resident);
    w_pad: (V_pad, E) bf16; b_pad: (1, V_pad) f32. Returns (B, V) f32 log-probs."""
    B, C = token_ids.shape
    V_pad, E = w_pad.shape
    B_pad = _round_up(B, 8)                    # sublane-dense batch
    n_tiles = V_pad // tv
    ids = token_ids.astype(jnp.int32)

    grid_spec = pltpu.PrefetchScalarGridSpec(
        num_scalar_prefetch=1,                                     # token ids -> SMEM
        grid=(n_tiles,),
        in_specs=[
            pl.BlockSpec(memory_space=pl.ANY),                     # emb table stays in HBM
            pl.BlockSpec((tv, E), lambda j, sids: (j, 0)),         # weight tile (natural layout)
            pl.BlockSpec((1, tv), lambda j, sids: (0, j)),         # bias tile
        ],
        out_specs=pl.BlockSpec((B_pad, V_pad), lambda j, sids: (0, 0)),  # resident log-probs
        scratch_shapes=[
            pltpu.VMEM((C, B_pad, E), jnp.float32),   # gathered embedding rows
            pltpu.VMEM((B_pad, E), jnp.bfloat16),     # context-summed embeddings (bf16, cast once)
            pltpu.VMEM((B_pad, 1), jnp.float32),      # running max
            pltpu.VMEM((B_pad, 1), jnp.float32),      # running sum-exp
            pltpu.SemaphoreType.DMA(()),              # gather DMA semaphore
        ],
    )

    log_probs = pl.pallas_call(
        cbow_fused_kernel,
        out_shape=jax.ShapeDtypeStruct((B_pad, V_pad), jnp.float32),
        grid_spec=grid_spec,
        compiler_params=pltpu.CompilerParams(
            # online-lse + resident output accumulate across vocab tiles -> sequential axis
            dimension_semantics=("arbitrary",)),
    )(ids, emb_table, w_pad, b_pad)

    return log_probs[:B, :vocab_size]


def cbow_reference(token_ids, emb_table, weight, bias):
    """Mirrors the kernel numerics (bf16 classifier matmul, f32 accumulation)."""
    embeds = jnp.sum(emb_table[token_ids], axis=1).astype(jnp.bfloat16)   # (B, E)
    logits = lax.dot_general(
        embeds, weight.astype(jnp.bfloat16),
        dimension_numbers=(((1,), (1,)), ((), ())),
        preferred_element_type=jnp.float32) + bias
    return jax.nn.log_softmax(logits, axis=-1)


if __name__ == "__main__":
    # Shapes consistent with the module: embedding_size=256, smallish vocab,
    # small batch of CBOW context windows. V is deliberately not a multiple of
    # 128 and B < 8 to exercise the padding path; tv=256 forces multiple vocab
    # tiles so the streamed online-logsumexp path is exercised.
    V, E, B, C = 1000, 256, 4, 6

    key = jax.random.PRNGKey(0)
    k_emb, k_w, k_b, k_idx = jax.random.split(key, 4)

    # nn.Embedding init ~ N(0, 1); nn.Linear init ~ U(-1/sqrt(E), 1/sqrt(E))
    emb_table = jax.random.normal(k_emb, (V, E), dtype=jnp.float32)
    bound = 1.0 / float(jnp.sqrt(jnp.float32(E)))
    weight = jax.random.uniform(k_w, (V, E), minval=-bound, maxval=bound,
                                dtype=jnp.float32)
    bias = jax.random.uniform(k_b, (V,), minval=-bound, maxval=bound,
                              dtype=jnp.float32)
    token_ids = jax.random.randint(k_idx, (B, C), 0, V, dtype=jnp.int32)

    # TODO(synk): the ISRIStemmer / vocab-building data pipeline around the
    # module is host-side preprocessing and has no Pallas equivalent.
    emb_p, w_p, b_p, tv, vsize = cbow_prepare_params(emb_table, weight, bias, tv=256)

    out = cbow_forward(token_ids, emb_p, w_p, b_p, tv=tv, vocab_size=vsize)
    out = jax.block_until_ready(out)

    ref = cbow_reference(token_ids, emb_table, weight, bias)
    assert out.shape == (B, V) and out.dtype == jnp.float32
    assert jnp.allclose(out, ref, atol=2e-3, rtol=2e-3), "mismatch vs reference"

    print("KERNEL_OK")
</pallas_src>

<mosaic_0001>
module attributes {stable_mosaic.version = 11 : i64} {
  func.func @cbow_fused_kernel(%arg0: i32, %arg1: memref<4x6xi32, #tpu.memory_space<smem>>, %arg2: memref<1000x256xf32, #tpu.memory_space<any>>, %arg3: memref<256x256xbf16, #tpu.memory_space<vmem>>, %arg4: memref<1x256xf32, #tpu.memory_space<vmem>>, %arg5: memref<8x1024xf32, #tpu.memory_space<vmem>>, %arg6: memref<6x8x256xf32, #tpu.memory_space<vmem>>, %arg7: memref<8x256xbf16, #tpu.memory_space<vmem>>, %arg8: memref<8x1xf32, #tpu.memory_space<vmem>>, %arg9: memref<8x1xf32, #tpu.memory_space<vmem>>, %arg10: memref<!tpu.dma_semaphore, #tpu.memory_space<semaphore_mem>>) attributes {dimension_semantics = [#tpu.dimension_semantics<arbitrary>], iteration_bounds = array<i64: 4>, scalar_prefetch = 1 : i64, scratch_operands = 5 : i64, tpu.core_type = #tpu.core_type<tc>, window_params = [{}, {transform_indices = @transform_1, window_bounds = array<i64: 256, 256>}, {transform_indices = @transform_2, window_bounds = array<i64: 1, 256>}, {pipeline_mode = #tpu.pipeline_mode<synchronous>, transform_indices = @transform_3, window_bounds = array<i64: 8, 1024>}]} {
    %c0_i32 = arith.constant 0 : i32
    %0 = arith.cmpi eq, %arg0, %c0_i32 : i32
    %1 = arith.extui %0 : i1 to i32
    %c0_i32_0 = arith.constant 0 : i32
    %2 = arith.cmpi ne, %1, %c0_i32_0 : i32
    scf.if %2 {
      %cst_18 = arith.constant 0xFF800000 : f32
      %32 = vector.broadcast %cst_18 : f32 to vector<8x1xf32>
      %c0_19 = arith.constant 0 : index
      %c0_20 = arith.constant 0 : index
      %33 = vector.load %arg8[%c0_19, %c0_20] : memref<8x1xf32, #tpu.memory_space<vmem>>, vector<8x1xf32>
      tpu.vector_store %arg8[%c0_19, %c0_20], %32 {strides = array<i32>} : memref<8x1xf32, #tpu.memory_space<vmem>>, vector<8x1xf32>,
      %cst_21 = arith.constant 0.000000e+00 : f32
      %34 = vector.broadcast %cst_21 : f32 to vector<8x1xf32>
      %c0_22 = arith.constant 0 : index
      %c0_23 = arith.constant 0 : index
      %35 = vector.load %arg9[%c0_22, %c0_23] : memref<8x1xf32, #tpu.memory_space<vmem>>, vector<8x1xf32>
      tpu.vector_store %arg9[%c0_22, %c0_23], %34 {strides = array<i32>} : memref<8x1xf32, #tpu.memory_space<vmem>>, vector<8x1xf32>,
      %c0_24 = arith.constant 0 : index
      %c0_25 = arith.constant 0 : index
      %36 = memref.load %arg1[%c0_24, %c0_25] : memref<4x6xi32, #tpu.memory_space<smem>>
      %c0_i32_26 = arith.constant 0 : i32
      %c0_i32_27 = arith.constant 0 : i32
      %37 = tpu.memref_slice %arg2[%36, %c0_i32_27] : memref<1000x256xf32, #tpu.memory_space<any>> -> memref<1x256xf32, #tpu.memory_space<any>>
      %c0_i32_28 = arith.constant 0 : i32
      %c0_i32_29 = arith.constant 0 : i32
      %38 = tpu.memref_slice %arg6[%c0_i32_26, %c0_i32_28, %c0_i32_29] : memref<6x8x256xf32, #tpu.memory_space<vmem>> -> memref<1x1x256xf32, #tpu.memory_space<vmem>>
      %39 = tpu.memref_squeeze %38 : memref<1x1x256xf32, #tpu.memory_space<vmem>> -> memref<1x256xf32, #tpu.memory_space<vmem>>
      tpu.enqueue_dma source(%37 : memref<1x256xf32, #tpu.memory_space<any>>) target(%39 : memref<1x256xf32, #tpu.memory_space<vmem>>) target_semaphore(%arg10 : memref<!tpu.dma_semaphore, #tpu.memory_space<semaphore_mem>>)
      %c0_30 = arith.constant 0 : index
      %c1 = arith.constant 1 : index
      %40 = memref.load %arg1[%c0_30, %c1] : memref<4x6xi32, #tpu.memory_space<smem>>
      %c1_i32 = arith.constant 1 : i32
      %c0_i32_31 = arith.constant 0 : i32
      %41 = tpu.memref_slice %arg2[%40, %c0_i32_31] : memref<1000x256xf32, #tpu.memory_space<any>> -> memref<1x256xf32, #tpu.memory_space<any>>
      %c0_i32_32 = arith.constant 0 : i32
      %c0_i32_33 = arith.constant 0 : i32
      %42 = tpu.memref_slice %arg6[%c1_i32, %c0_i32_32, %c0_i32_33] : memref<6x8x256xf32, #tpu.memory_space<vmem>> -> memref<1x1x256xf32, #tpu.memory_space<vmem>>
      %43 = tpu.memref_squeeze %42 : memref<1x1x256xf32, #tpu.memory_space<vmem>> -> memref<1x256xf32, #tpu.memory_space<vmem>>
      tpu.enqueue_dma source(%41 : memref<1x256xf32, #tpu.memory_space<any>>) target(%43 : memref<1x256xf32, #tpu.memory_space<vmem>>) target_semaphore(%arg10 : memref<!tpu.dma_semaphore, #tpu.memory_space<semaphore_mem>>)
      %c0_34 = arith.constant 0 : index
      %c2 = arith.constant 2 : index
      %44 = memref.load %arg1[%c0_34, %c2] : memref<4x6xi32, #tpu.memory_space<smem>>
      %c2_i32 = arith.constant 2 : i32
      %c0_i32_35 = arith.constant 0 : i32
      %45 = tpu.memref_slice %arg2[%44, %c0_i32_35] : memref<1000x256xf32, #tpu.memory_space<any>> -> memref<1x256xf32, #tpu.memory_space<any>>
      %c0_i32_36 = arith.constant 0 : i32
      %c0_i32_37 = arith.constant 0 : i32
      %46 = tpu.memref_slice %arg6[%c2_i32, %c0_i32_36, %c0_i32_37] : memref<6x8x256xf32, #tpu.memory_space<vmem>> -> memref<1x1x256xf32, #tpu.memory_space<vmem>>
      %47 = tpu.memref_squeeze %46 : memref<1x1x256xf32, #tpu.memory_space<vmem>> -> memref<1x256xf32, #tpu.memory_space<vmem>>
      tpu.enqueue_dma source(%45 : memref<1x256xf32, #tpu.memory_space<any>>) target(%47 : memref<1x256xf32, #tpu.memory_space<vmem>>) target_semaphore(%arg10 : memref<!tpu.dma_semaphore, #tpu.memory_space<semaphore_mem>>)
      %c0_38 = arith.constant 0 : index
      %c3 = arith.constant 3 : index
      %48 = memref.load %arg1[%c0_38, %c3] : memref<4x6xi32, #tpu.memory_space<smem>>
      %c3_i32_39 = arith.constant 3 : i32
      %c0_i32_40 = arith.constant 0 : i32
      %49 = tpu.memref_slice %arg2[%48, %c0_i32_40] : memref<1000x256xf32, #tpu.memory_space<any>> -> memref<1x256xf32, #tpu.memory_space<any>>
      %c0_i32_41 = arith.constant 0 : i32
      %c0_i32_42 = arith.constant 0 : i32
      %50 = tpu.memref_slice %arg6[%c3_i32_39, %c0_i32_41, %c0_i32_42] : memref<6x8x256xf32, #tpu.memory_space<vmem>> -> memref<1x1x256xf32, #tpu.memory_space<vmem>>
      %51 = tpu.memref_squeeze %50 : memref<1x1x256xf32, #tpu.memory_space<vmem>> -> memref<1x256xf32, #tpu.memory_space<vmem>>
      tpu.enqueue_dma source(%49 : memref<1x256xf32, #tpu.memory_space<any>>) target(%51 : memref<1x256xf32, #tpu.memory_space<vmem>>) target_semaphore(%arg10 : memref<!tpu.dma_semaphore, #tpu.memory_space<semaphore_mem>>)
      %c0_43 = arith.constant 0 : index
      %c4 = arith.constant 4 : index
      %52 = memref.load %arg1[%c0_43, %c4] : memref<4x6xi32, #tpu.memory_space<smem>>
      %c4_i32 = arith.constant 4 : i32
      %c0_i32_44 = arith.constant 0 : i32
      %53 = tpu.memref_slice %arg2[%52, %c0_i32_44] : memref<1000x256xf32, #tpu.memory_space<any>> -> memref<1x256xf32, #tpu.memory_space<any>>
      %c0_i32_45 = arith.constant 0 : i32
      %c0_i32_46 = arith.constant 0 : i32
      %54 = tpu.memref_slice %arg6[%c4_i32, %c0_i32_45, %c0_i32_46] : memref<6x8x256xf32, #tpu.memory_space<vmem>> -> memref<1x1x256xf32, #tpu.memory_space<vmem>>
      %55 = tpu.memref_squeeze %54 : memref<1x1x256xf32, #tpu.memory_space<vmem>> -> memref<1x256xf32, #tpu.memory_space<vmem>>
      tpu.enqueue_dma source(%53 : memref<1x256xf32, #tpu.memory_space<any>>) target(%55 : memref<1x256xf32, #tpu.memory_space<vmem>>) target_semaphore(%arg10 : memref<!tpu.dma_semaphore, #tpu.memory_space<semaphore_mem>>)
      %c0_47 = arith.constant 0 : index
      %c5 = arith.constant 5 : index
      %56 = memref.load %arg1[%c0_47, %c5] : memref<4x6xi32, #tpu.memory_space<smem>>
      %c5_i32 = arith.constant 5 : i32
      %c0_i32_48 = arith.constant 0 : i32
      %57 = tpu.memref_slice %arg2[%56, %c0_i32_48] : memref<1000x256xf32, #tpu.memory_space<any>> -> memref<1x256xf32, #tpu.memory_space<any>>
      %c0_i32_49 = arith.constant 0 : i32
      %c0_i32_50 = arith.constant 0 : i32
      %58 = tpu.memref_slice %arg6[%c5_i32, %c0_i32_49, %c0_i32_50] : memref<6x8x256xf32, #tpu.memory_space<vmem>> -> memref<1x1x256xf32, #tpu.memory_space<vmem>>
      %59 = tpu.memref_squeeze %58 : memref<1x1x256xf32, #tpu.memory_space<vmem>> -> memref<1x256xf32, #tpu.memory_space<vmem>>
      tpu.enqueue_dma source(%57 : memref<1x256xf32, #tpu.memory_space<any>>) target(%59 : memref<1x256xf32, #tpu.memory_space<vmem>>) target_semaphore(%arg10 : memref<!tpu.dma_semaphore, #tpu.memory_space<semaphore_mem>>)
      %c1_51 = arith.constant 1 : index
      %c0_52 = arith.constant 0 : index
      %60 = memref.load %arg1[%c1_51, %c0_52] : memref<4x6xi32, #tpu.memory_space<smem>>
      %c0_i32_53 = arith.constant 0 : i32
      %c0_i32_54 = arith.constant 0 : i32
      %61 = tpu.memref_slice %arg2[%60, %c0_i32_54] : memref<1000x256xf32, #tpu.memory_space<any>> -> memref<1x256xf32, #tpu.memory_space<any>>
      %c1_i32_55 = arith.constant 1 : i32
      %c0_i32_56 = arith.constant 0 : i32
      %62 = tpu.memref_slice %arg6[%c0_i32_53, %c1_i32_55, %c0_i32_56] : memref<6x8x256xf32, #tpu.memory_space<vmem>> -> memref<1x1x256xf32, #tpu.memory_space<vmem>>
      %63 = tpu.memref_squeeze %62 : memref<1x1x256xf32, #tpu.memory_space<vmem>> -> memref<1x256xf32, #tpu.memory_space<vmem>>
      tpu.enqueue_dma source(%61 : memref<1x256xf32, #tpu.memory_space<any>>) target(%63 : memref<1x256xf32, #tpu.memory_space<vmem>>) target_semaphore(%arg10 : memref<!tpu.dma_semaphore, #tpu.memory_space<semaphore_mem>>)
      %c1_57 = arith.constant 1 : index
      %c1_58 = arith.constant 1 : index
      %64 = memref.load %arg1[%c1_57, %c1_58] : memref<4x6xi32, #tpu.memory_space<smem>>
      %c1_i32_59 = arith.constant 1 : i32
      %c0_i32_60 = arith.constant 0 : i32
      %65 = tpu.memref_slice %arg2[%64, %c0_i32_60] : memref<1000x256xf32, #tpu.memory_space<any>> -> memref<1x256xf32, #tpu.memory_space<any>>
      %c1_i32_61 = arith.constant 1 : i32
      %c0_i32_62 = arith.constant 0 : i32
      %66 = tpu.memref_slice %arg6[%c1_i32_59, %c1_i32_61, %c0_i32_62] : memref<6x8x256xf32, #tpu.memory_space<vmem>> -> memref<1x1x256xf32, #tpu.memory_space<vmem>>
      %67 = tpu.memref_squeeze %66 : memref<1x1x256xf32, #tpu.memory_space<vmem>> -> memref<1x256xf32, #tpu.memory_space<vmem>>
      tpu.enqueue_dma source(%65 : memref<1x256xf32, #tpu.memory_space<any>>) target(%67 : memref<1x256xf32, #tpu.memory_space<vmem>>) target_semaphore(%arg10 : memref<!tpu.dma_semaphore, #tpu.memory_space<semaphore_mem>>)
      %c1_63 = arith.constant 1 : index
      %c2_64 = arith.constant 2 : index
      %68 = memref.load %arg1[%c1_63, %c2_64] : memref<4x6xi32, #tpu.memory_space<smem>>
      %c2_i32_65 = arith.constant 2 : i32
      %c0_i32_66 = arith.constant 0 : i32
      %69 = tpu.memref_slice %arg2[%68, %c0_i32_66] : memref<1000x256xf32, #tpu.memory_space<any>> -> memref<1x256xf32, #tpu.memory_space<any>>
      %c1_i32_67 = arith.constant 1 : i32
      %c0_i32_68 = arith.constant 0 : i32
      %70 = tpu.memref_slice %arg6[%c2_i32_65, %c1_i32_67, %c0_i32_68] : memref<6x8x256xf32, #tpu.memory_space<vmem>> -> memref<1x1x256xf32, #tpu.memory_space<vmem>>
      %71 = tpu.memref_squeeze %70 : memref<1x1x256xf32, #tpu.memory_space<vmem>> -> memref<1x256xf32, #tpu.memory_space<vmem>>
      tpu.enqueue_dma source(%69 : memref<1x256xf32, #tpu.memory_space<any>>) target(%71 : memref<1x256xf32, #tpu.memory_space<vmem>>) target_semaphore(%arg10 : memref<!tpu.dma_semaphore, #tpu.memory_space<semaphore_mem>>)
      %c1_69 = arith.constant 1 : index
      %c3_70 = arith.constant 3 : index
      %72 = memref.load %arg1[%c1_69, %c3_70] : memref<4x6xi32, #tpu.memory_space<smem>>
      %c3_i32_71 = arith.constant 3 : i32
      %c0_i32_72 = arith.constant 0 : i32
      %73 = tpu.memref_slice %arg2[%72, %c0_i32_72] : memref<1000x256xf32, #tpu.memory_space<any>> -> memref<1x256xf32, #tpu.memory_space<any>>
      %c1_i32_73 = arith.constant 1 : i32
      %c0_i32_74 = arith.constant 0 : i32
      %74 = tpu.memref_slice %arg6[%c3_i32_71, %c1_i32_73, %c0_i32_74] : memref<6x8x256xf32, #tpu.memory_space<vmem>> -> memref<1x1x256xf32, #tpu.memory_space<vmem>>
      %75 = tpu.memref_squeeze %74 : memref<1x1x256xf32, #tpu.memory_space<vmem>> -> memref<1x256xf32, #tpu.memory_space<vmem>>
      tpu.enqueue_dma source(%73 : memref<1x256xf32, #tpu.memory_space<any>>) target(%75 : memref<1x256xf32, #tpu.memory_space<vmem>>) target_semaphore(%arg10 : memref<!tpu.dma_semaphore, #tpu.memory_space<semaphore_mem>>)
      %c1_75 = arith.constant 1 : index
      %c4_76 = arith.constant 4 : index
      %76 = memref.load %arg1[%c1_75, %c4_76] : memref<4x6xi32, #tpu.memory_space<smem>>
      %c4_i32_77 = arith.constant 4 : i32
      %c0_i32_78 = arith.constant 0 : i32
      %77 = tpu.memref_slice %arg2[%76, %c0_i32_78] : memref<1000x256xf32, #tpu.memory_space<any>> -> memref<1x256xf32, #tpu.memory_space<any>>
      %c1_i32_79 = arith.constant 1 : i32
      %c0_i32_80 = arith.constant 0 : i32
      %78 = tpu.memref_slice %arg6[%c4_i32_77, %c1_i32_79, %c0_i32_80] : memref<6x8x256xf32, #tpu.memory_space<vmem>> -> memref<1x1x256xf32, #tpu.memory_space<vmem>>
      %79 = tpu.memref_squeeze %78 : memref<1x1x256xf32, #tpu.memory_space<vmem>> -> memref<1x256xf32, #tpu.memory_space<vmem>>
      tpu.enqueue_dma source(%77 : memref<1x256xf32, #tpu.memory_space<any>>) target(%79 : memref<1x256xf32, #tpu.memory_space<vmem>>) target_semaphore(%arg10 : memref<!tpu.dma_semaphore, #tpu.memory_space<semaphore_mem>>)
      %c1_81 = arith.constant 1 : index
      %c5_82 = arith.constant 5 : index
      %80 = memref.load %arg1[%c1_81, %c5_82] : memref<4x6xi32, #tpu.memory_space<smem>>
      %c5_i32_83 = arith.constant 5 : i32
      %c0_i32_84 = arith.constant 0 : i32
      %81 = tpu.memref_slice %arg2[%80, %c0_i32_84] : memref<1000x256xf32, #tpu.memory_space<any>> -> memref<1x256xf32, #tpu.memory_space<any>>
      %c1_i32_85 = arith.constant 1 : i32
      %c0_i32_86 = arith.constant 0 : i32
      %82 = tpu.memref_slice %arg6[%c5_i32_83, %c1_i32_85, %c0_i32_86] : memref<6x8x256xf32, #tpu.memory_space<vmem>> -> memref<1x1x256xf32, #tpu.memory_space<vmem>>
      %83 = tpu.memref_squeeze %82 : memref<1x1x256xf32, #tpu.memory_space<vmem>> -> memref<1x256xf32, #tpu.memory_space<vmem>>
      tpu.enqueue_dma source(%81 : memref<1x256xf32, #tpu.memory_space<any>>) target(%83 : memref<1x256xf32, #tpu.memory_space<vmem>>) target_semaphore(%arg10 : memref<!tpu.dma_semaphore, #tpu.memory_space<semaphore_mem>>)
      %c2_87 = arith.constant 2 : index
      %c0_88 = arith.constant 0 : index
      %84 = memref.load %arg1[%c2_87, %c0_88] : memref<4x6xi32, #tpu.memory_space<smem>>
      %c0_i32_89 = arith.constant 0 : i32
      %c0_i32_90 = arith.constant 0 : i32
      %85 = tpu.memref_slice %arg2[%84, %c0_i32_90] : memref<1000x256xf32, #tpu.memory_space<any>> -> memref<1x256xf32, #tpu.memory_space<any>>
      %c2_i32_91 = arith.constant 2 : i32
      %c0_i32_92 = arith.constant 0 : i32
      %86 = tpu.memref_slice %arg6[%c0_i32_89, %c2_i32_91, %c0_i32_92] : memref<6x8x256xf32, #tpu.memory_space<vmem>> -> memref<1x1x256xf32, #tpu.memory_space<vmem>>
      %87 = tpu.memref_squeeze %86 : memref<1x1x256xf32, #tpu.memory_space<vmem>> -> memref<1x256xf32, #tpu.memory_space<vmem>>
      tpu.enqueue_dma source(%85 : memref<1x256xf32, #tpu.memory_space<any>>) target(%87 : memref<1x256xf32, #tpu.memory_space<vmem>>) target_semaphore(%arg10 : memref<!tpu.dma_semaphore, #tpu.memory_space<semaphore_mem>>)
      %c2_93 = arith.constant 2 : index
      %c1_94 = arith.constant 1 : index
      %88 = memref.load %arg1[%c2_93, %c1_94] : memref<4x6xi32, #tpu.memory_space<smem>>
      %c1_i32_95 = arith.constant 1 : i32
      %c0_i32_96 = arith.constant 0 : i32
      %89 = tpu.memref_slice %arg2[%88, %c0_i32_96] : memref<1000x256xf32, #tpu.memory_space<any>> -> memref<1x256xf32, #tpu.memory_space<any>>
      %c2_i32_97 = arith.constant 2 : i32
      %c0_i32_98 = arith.constant 0 : i32
      %90 = tpu.memref_slice %arg6[%c1_i32_95, %c2_i32_97, %c0_i32_98] : memref<6x8x256xf32, #tpu.memory_space<vmem>> -> memref<1x1x256xf32, #tpu.memory_space<vmem>>
      %91 = tpu.memref_squeeze %90 : memref<1x1x256xf32, #tpu.memory_space<vmem>> -> memref<1x256xf32, #tpu.memory_space<vmem>>
      tpu.enqueue_dma source(%89 : memref<1x256xf32, #tpu.memory_space<any>>) target(%91 : memref<1x256xf32, #tpu.memory_space<vmem>>) target_semaphore(%arg10 : memref<!tpu.dma_semaphore, #tpu.memory_space<semaphore_mem>>)
      %c2_99 = arith.constant 2 : index
      %c2_100 = arith.constant 2 : index
      %92 = memref.load %arg1[%c2_99, %c2_100] : memref<4x6xi32, #tpu.memory_space<smem>>
      %c2_i32_101 = arith.constant 2 : i32
      %c0_i32_102 = arith.constant 0 : i32
      %93 = tpu.memref_slice %arg2[%92, %c0_i32_102] : memref<1000x256xf32, #tpu.memory_space<any>> -> memref<1x256xf32, #tpu.memory_space<any>>
      %c2_i32_103 = arith.constant 2 : i32
      %c0_i32_104 = arith.constant 0 : i32
      %94 = tpu.memref_slice %arg6[%c2_i32_101, %c2_i32_103, %c0_i32_104] : memref<6x8x256xf32, #tpu.memory_space<vmem>> -> memref<1x1x256xf32, #tpu.memory_space<vmem>>
      %95 = tpu.memref_squeeze %94 : memref<1x1x256xf32, #tpu.memory_space<vmem>> -> memref<1x256xf32, #tpu.memory_space<vmem>>
      tpu.enqueue_dma source(%93 : memref<1x256xf32, #tpu.memory_space<any>>) target(%95 : memref<1x256xf32, #tpu.memory_space<vmem>>) target_semaphore(%arg10 : memref<!tpu.dma_semaphore, #tpu.memory_space<semaphore_mem>>)
      %c2_105 = arith.constant 2 : index
      %c3_106 = arith.constant 3 : index
      %96 = memref.load %arg1[%c2_105, %c3_106] : memref<4x6xi32, #tpu.memory_space<smem>>
      %c3_i32_107 = arith.constant 3 : i32
      %c0_i32_108 = arith.constant 0 : i32
      %97 = tpu.memref_slice %arg2[%96, %c0_i32_108] : memref<1000x256xf32, #tpu.memory_space<any>> -> memref<1x256xf32, #tpu.memory_space<any>>
      %c2_i32_109 = arith.constant 2 : i32
      %c0_i32_110 = arith.constant 0 : i32
      %98 = tpu.memref_slice %arg6[%c3_i32_107, %c2_i32_109, %c0_i32_110] : memref<6x8x256xf32, #tpu.memory_space<vmem>> -> memref<1x1x256xf32, #tpu.memory_space<vmem>>
      %99 = tpu.memref_squeeze %98 : memref<1x1x256xf32, #tpu.memory_space<vmem>> -> memref<1x256xf32, #tpu.memory_space<vmem>>
      tpu.enqueue_dma source(%97 : memref<1x256xf32, #tpu.memory_space<any>>) target(%99 : memref<1x256xf32, #tpu.memory_space<vmem>>) target_semaphore(%arg10 : memref<!tpu.dma_semaphore, #tpu.memory_space<semaphore_mem>>)
      %c2_111 = arith.constant 2 : index
      %c4_112 = arith.constant 4 : index
      %100 = memref.load %arg1[%c2_111, %c4_112] : memref<4x6xi32, #tpu.memory_space<smem>>
      %c4_i32_113 = arith.constant 4 : i32
      %c0_i32_114 = arith.constant 0 : i32
      %101 = tpu.memref_slice %arg2[%100, %c0_i32_114] : memref<1000x256xf32, #tpu.memory_space<any>> -> memref<1x256xf32, #tpu.memory_space<any>>
      %c2_i32_115 = arith.constant 2 : i32
      %c0_i32_116 = arith.constant 0 : i32
      %102 = tpu.memref_slice %arg6[%c4_i32_113, %c2_i32_115, %c0_i32_116] : memref<6x8x256xf32, #tpu.memory_space<vmem>> -> memref<1x1x256xf32, #tpu.memory_space<vmem>>
      %103 = tpu.memref_squeeze %102 : memref<1x1x256xf32, #tpu.memory_space<vmem>> -> memref<1x256xf32, #tpu.memory_space<vmem>>
      tpu.enqueue_dma source(%101 : memref<1x256xf32, #tpu.memory_space<any>>) target(%103 : memref<1x256xf32, #tpu.memory_space<vmem>>) target_semaphore(%arg10 : memref<!tpu.dma_semaphore, #tpu.memory_space<semaphore_mem>>)
      %c2_117 = arith.constant 2 : index
      %c5_118 = arith.constant 5 : index
      %104 = memref.load %arg1[%c2_117, %c5_118] : memref<4x6xi32, #tpu.memory_space<smem>>
      %c5_i32_119 = arith.constant 5 : i32
      %c0_i32_120 = arith.constant 0 : i32
      %105 = tpu.memref_slice %arg2[%104, %c0_i32_120] : memref<1000x256xf32, #tpu.memory_space<any>> -> memref<1x256xf32, #tpu.memory_space<any>>
      %c2_i32_121 = arith.constant 2 : i32
      %c0_i32_122 = arith.constant 0 : i32
      %106 = tpu.memref_slice %arg6[%c5_i32_119, %c2_i32_121, %c0_i32_122] : memref<6x8x256xf32, #tpu.memory_space<vmem>> -> memref<1x1x256xf32, #tpu.memory_space<vmem>>
      %107 = tpu.memref_squeeze %106 : memref<1x1x256xf32, #tpu.memory_space<vmem>> -> memref<1x256xf32, #tpu.memory_space<vmem>>
      tpu.enqueue_dma source(%105 : memref<1x256xf32, #tpu.memory_space<any>>) target(%107 : memref<1x256xf32, #tpu.memory_space<vmem>>) target_semaphore(%arg10 : memref<!tpu.dma_semaphore, #tpu.memory_space<semaphore_mem>>)
      %c3_123 = arith.constant 3 : index
      %c0_124 = arith.constant 0 : index
      %108 = memref.load %arg1[%c3_123, %c0_124] : memref<4x6xi32, #tpu.memory_space<smem>>
      %c0_i32_125 = arith.constant 0 : i32
      %c0_i32_126 = arith.constant 0 : i32
      %109 = tpu.memref_slice %arg2[%108, %c0_i32_126] : memref<1000x256xf32, #tpu.memory_space<any>> -> memref<1x256xf32, #tpu.memory_space<any>>
      %c3_i32_127 = arith.constant 3 : i32
      %c0_i32_128 = arith.constant 0 : i32
      %110 = tpu.memref_slice %arg6[%c0_i32_125, %c3_i32_127, %c0_i32_128] : memref<6x8x256xf32, #tpu.memory_space<vmem>> -> memref<1x1x256xf32, #tpu.memory_space<vmem>>
      %111 = tpu.memref_squeeze %110 : memref<1x1x256xf32, #tpu.memory_space<vmem>> -> memref<1x256xf32, #tpu.memory_space<vmem>>
      tpu.enqueue_dma source(%109 : memref<1x256xf32, #tpu.memory_space<any>>) target(%111 : memref<1x256xf32, #tpu.memory_space<vmem>>) target_semaphore(%arg10 : memref<!tpu.dma_semaphore, #tpu.memory_space<semaphore_mem>>)
      %c3_129 = arith.constant 3 : index
      %c1_130 = arith.constant 1 : index
      %112 = memref.load %arg1[%c3_129, %c1_130] : memref<4x6xi32, #tpu.memory_space<smem>>
      %c1_i32_131 = arith.constant 1 : i32
      %c0_i32_132 = arith.constant 0 : i32
      %113 = tpu.memref_slice %arg2[%112, %c0_i32_132] : memref<1000x256xf32, #tpu.memory_space<any>> -> memref<1x256xf32, #tpu.memory_space<any>>
      %c3_i32_133 = arith.constant 3 : i32
      %c0_i32_134 = arith.constant 0 : i32
      %114 = tpu.memref_slice %arg6[%c1_i32_131, %c3_i32_133, %c0_i32_134] : memref<6x8x256xf32, #tpu.memory_space<vmem>> -> memref<1x1x256xf32, #tpu.memory_space<vmem>>
      %115 = tpu.memref_squeeze %114 : memref<1x1x256xf32, #tpu.memory_space<vmem>> -> memref<1x256xf32, #tpu.memory_space<vmem>>
      tpu.enqueue_dma source(%113 : memref<1x256xf32, #tpu.memory_space<any>>) target(%115 : memref<1x256xf32, #tpu.memory_space<vmem>>) target_semaphore(%arg10 : memref<!tpu.dma_semaphore, #tpu.memory_space<semaphore_mem>>)
      %c3_135 = arith.constant 3 : index
      %c2_136 = arith.constant 2 : index
      %116 = memref.load %arg1[%c3_135, %c2_136] : memref<4x6xi32, #tpu.memory_space<smem>>
      %c2_i32_137 = arith.constant 2 : i32
      %c0_i32_138 = arith.constant 0 : i32
      %117 = tpu.memref_slice %arg2[%116, %c0_i32_138] : memref<1000x256xf32, #tpu.memory_space<any>> -> memref<1x256xf32, #tpu.memory_space<any>>
      %c3_i32_139 = arith.constant 3 : i32
      %c0_i32_140 = arith.constant 0 : i32
      %118 = tpu.memref_slice %arg6[%c2_i32_137, %c3_i32_139, %c0_i32_140] : memref<6x8x256xf32, #tpu.memory_space<vmem>> -> memref<1x1x256xf32, #tpu.memory_space<vmem>>
      %119 = tpu.memref_squeeze %118 : memref<1x1x256xf32, #tpu.memory_space<vmem>> -> memref<1x256xf32, #tpu.memory_space<vmem>>
      tpu.enqueue_dma source(%117 : memref<1x256xf32, #tpu.memory_space<any>>) target(%119 : memref<1x256xf32, #tpu.memory_space<vmem>>) target_semaphore(%arg10 : memref<!tpu.dma_semaphore, #tpu.memory_space<semaphore_mem>>)
      %c3_141 = arith.constant 3 : index
      %c3_142 = arith.constant 3 : index
      %120 = memref.load %arg1[%c3_141, %c3_142] : memref<4x6xi32, #tpu.memory_space<smem>>
      %c3_i32_143 = arith.constant 3 : i32
      %c0_i32_144 = arith.constant 0 : i32
      %121 = tpu.memref_slice %arg2[%120, %c0_i32_144] : memref<1000x256xf32, #tpu.memory_space<any>> -> memref<1x256xf32, #tpu.memory_space<any>>
      %c3_i32_145 = arith.constant 3 : i32
      %c0_i32_146 = arith.constant 0 : i32
      %122 = tpu.memref_slice %arg6[%c3_i32_143, %c3_i32_145, %c0_i32_146] : memref<6x8x256xf32, #tpu.memory_space<vmem>> -> memref<1x1x256xf32, #tpu.memory_space<vmem>>
      %123 = tpu.memref_squeeze %122 : memref<1x1x256xf32, #tpu.memory_space<vmem>> -> memref<1x256xf32, #tpu.memory_space<vmem>>
      tpu.enqueue_dma source(%121 : memref<1x256xf32, #tpu.memory_space<any>>) target(%123 : memref<1x256xf32, #tpu.memory_space<vmem>>) target_semaphore(%arg10 : memref<!tpu.dma_semaphore, #tpu.memory_space<semaphore_mem>>)
      %c3_147 = arith.constant 3 : index
      %c4_148 = arith.constant 4 : index
      %124 = memref.load %arg1[%c3_147, %c4_148] : memref<4x6xi32, #tpu.memory_space<smem>>
      %c4_i32_149 = arith.constant 4 : i32
      %c0_i32_150 = arith.constant 0 : i32
      %125 = tpu.memref_slice %arg2[%124, %c0_i32_150] : memref<1000x256xf32, #tpu.memory_space<any>> -> memref<1x256xf32, #tpu.memory_space<any>>
      %c3_i32_151 = arith.constant 3 : i32
      %c0_i32_152 = arith.constant 0 : i32
      %126 = tpu.memref_slice %arg6[%c4_i32_149, %c3_i32_151, %c0_i32_152] : memref<6x8x256xf32, #tpu.memory_space<vmem>> -> memref<1x1x256xf32, #tpu.memory_space<vmem>>
      %127 = tpu.memref_squeeze %126 : memref<1x1x256xf32, #tpu.memory_space<vmem>> -> memref<1x256xf32, #tpu.memory_space<vmem>>
      tpu.enqueue_dma source(%125 : memref<1x256xf32, #tpu.memory_space<any>>) target(%127 : memref<1x256xf32, #tpu.memory_space<vmem>>) target_semaphore(%arg10 : memref<!tpu.dma_semaphore, #tpu.memory_space<semaphore_mem>>)
      %c3_153 = arith.constant 3 : index
      %c5_154 = arith.constant 5 : index
      %128 = memref.load %arg1[%c3_153, %c5_154] : memref<4x6xi32, #tpu.memory_space<smem>>
      %c5_i32_155 = arith.constant 5 : i32
      %c0_i32_156 = arith.constant 0 : i32
      %129 = tpu.memref_slice %arg2[%128, %c0_i32_156] : memref<1000x256xf32, #tpu.memory_space<any>> -> memref<1x256xf32, #tpu.memory_space<any>>
      %c3_i32_157 = arith.constant 3 : i32
      %c0_i32_158 = arith.constant 0 : i32
      %130 = tpu.memref_slice %arg6[%c5_i32_155, %c3_i32_157, %c0_i32_158] : memref<6x8x256xf32, #tpu.memory_space<vmem>> -> memref<1x1x256xf32, #tpu.memory_space<vmem>>
      %131 = tpu.memref_squeeze %130 : memref<1x1x256xf32, #tpu.memory_space<vmem>> -> memref<1x256xf32, #tpu.memory_space<vmem>>
      tpu.enqueue_dma source(%129 : memref<1x256xf32, #tpu.memory_space<any>>) target(%131 : memref<1x256xf32, #tpu.memory_space<vmem>>) target_semaphore(%arg10 : memref<!tpu.dma_semaphore, #tpu.memory_space<semaphore_mem>>)
      %c0_i32_159 = arith.constant 0 : i32
      %c0_i32_160 = arith.constant 0 : i32
      %132 = tpu.memref_slice %arg2[%36, %c0_i32_160] : memref<1000x256xf32, #tpu.memory_space<any>> -> memref<1x256xf32, #tpu.memory_space<any>>
      %c0_i32_161 = arith.constant 0 : i32
      %c0_i32_162 = arith.constant 0 : i32
      %133 = tpu.memref_slice %arg6[%c0_i32_159, %c0_i32_161, %c0_i32_162] : memref<6x8x256xf32, #tpu.memory_space<vmem>> -> memref<1x1x256xf32, #tpu.memory_space<vmem>>
      %134 = tpu.memref_squeeze %133 : memref<1x1x256xf32, #tpu.memory_space<vmem>> -> memref<1x256xf32, #tpu.memory_space<vmem>>
      tpu.wait_dma2 semaphore(%arg10 : memref<!tpu.dma_semaphore, #tpu.memory_space<semaphore_mem>>) src(%132 : memref<1x256xf32, #tpu.memory_space<any>>) dst(%134 : memref<1x256xf32, #tpu.memory_space<vmem>>)
      %c1_i32_163 = arith.constant 1 : i32
      %c0_i32_164 = arith.constant 0 : i32
      %135 = tpu.memref_slice %arg2[%40, %c0_i32_164] : memref<1000x256xf32, #tpu.memory_space<any>> -> memref<1x256xf32, #tpu.memory_space<any>>
      %c0_i32_165 = arith.constant 0 : i32
      %c0_i32_166 = arith.constant 0 : i32
      %136 = tpu.memref_slice %arg6[%c1_i32_163, %c0_i32_165, %c0_i32_166] : memref<6x8x256xf32, #tpu.memory_space<vmem>> -> memref<1x1x256xf32, #tpu.memory_space<vmem>>
      %137 = tpu.memref_squeeze %136 : memref<1x1x256xf32, #tpu.memory_space<vmem>> -> memref<1x256xf32, #tpu.memory_space<vmem>>
      tpu.wait_dma2 semaphore(%arg10 : memref<!tpu.dma_semaphore, #tpu.memory_space<semaphore_mem>>) src(%135 : memref<1x256xf32, #tpu.memory_space<any>>) dst(%137 : memref<1x256xf32, #tpu.memory_space<vmem>>)
      %c2_i32_167 = arith.constant 2 : i32
      %c0_i32_168 = arith.constant 0 : i32
      %138 = tpu.memref_slice %arg2[%44, %c0_i32_168] : memref<1000x256xf32, #tpu.memory_space<any>> -> memref<1x256xf32, #tpu.memory_space<any>>
      %c0_i32_169 = arith.constant 0 : i32
      %c0_i32_170 = arith.constant 0 : i32
      %139 = tpu.memref_slice %arg6[%c2_i32_167, %c0_i32_169, %c0_i32_170] : memref<6x8x256xf32, #tpu.memory_space<vmem>> -> memref<1x1x256xf32, #tpu.memory_space<vmem>>
      %140 = tpu.memref_squeeze %139 : memref<1x1x256xf32, #tpu.memory_space<vmem>> -> memref<1x256xf32, #tpu.memory_space<vmem>>
      tpu.wait_dma2 semaphore(%arg10 : memref<!tpu.dma_semaphore, #tpu.memory_space<semaphore_mem>>) src(%138 : memref<1x256xf32, #tpu.memory_space<any>>) dst(%140 : memref<1x256xf32, #tpu.memory_space<vmem>>)
      %c3_i32_171 = arith.constant 3 : i32
      %c0_i32_172 = arith.constant 0 : i32
      %141 = tpu.memref_slice %arg2[%48, %c0_i32_172] : memref<1000x256xf32, #tpu.memory_space<any>> -> memref<1x256xf32, #tpu.memory_space<any>>
      %c0_i32_173 = arith.constant 0 : i32
      %c0_i32_174 = arith.constant 0 : i32
      %142 = tpu.memref_slice %arg6[%c3_i32_171, %c0_i32_173, %c0_i32_174] : memref<6x8x256xf32, #tpu.memory_space<vmem>> -> memref<1x1x256xf32, #tpu.memory_space<vmem>>
      %143 = tpu.memref_squeeze %142 : memref<1x1x256xf32, #tpu.memory_space<vmem>> -> memref<1x256xf32, #tpu.memory_space<vmem>>
      tpu.wait_dma2 semaphore(%arg10 : memref<!tpu.dma_semaphore, #tpu.memory_space<semaphore_mem>>) src(%141 : memref<1x256xf32, #tpu.memory_space<any>>) dst(%143 : memref<1x256xf32, #tpu.memory_space<vmem>>)
      %c4_i32_175 = arith.constant 4 : i32
      %c0_i32_176 = arith.constant 0 : i32
      %144 = tpu.memref_slice %arg2[%52, %c0_i32_176] : memref<1000x256xf32, #tpu.memory_space<any>> -> memref<1x256xf32, #tpu.memory_space<any>>
      %c0_i32_177 = arith.constant 0 : i32
      %c0_i32_178 = arith.constant 0 : i32
      %145 = tpu.memref_slice %arg6[%c4_i32_175, %c0_i32_177, %c0_i32_178] : memref<6x8x256xf32, #tpu.memory_space<vmem>> -> memref<1x1x256xf32, #tpu.memory_space<vmem>>
      %146 = tpu.memref_squeeze %145 : memref<1x1x256xf32, #tpu.memory_space<vmem>> -> memref<1x256xf32, #tpu.memory_space<vmem>>
      tpu.wait_dma2 semaphore(%arg10 : memref<!tpu.dma_semaphore, #tpu.memory_space<semaphore_mem>>) src(%144 : memref<1x256xf32, #tpu.memory_space<any>>) dst(%146 : memref<1x256xf32, #tpu.memory_space<vmem>>)
      %c5_i32_179 = arith.constant 5 : i32
      %c0_i32_180 = arith.constant 0 : i32
      %147 = tpu.memref_slice %arg2[%56, %c0_i32_180] : memref<1000x256xf32, #tpu.memory_space<any>> -> memref<1x256xf32, #tpu.memory_space<any>>
      %c0_i32_181 = arith.constant 0 : i32
      %c0_i32_182 = arith.constant 0 : i32
      %148 = tpu.memref_slice %arg6[%c5_i32_179, %c0_i32_181, %c0_i32_182] : memref<6x8x256xf32, #tpu.memory_space<vmem>> -> memref<1x1x256xf32, #tpu.memory_space<vmem>>
      %149 = tpu.memref_squeeze %148 : memref<1x1x256xf32, #tpu.memory_space<vmem>> -> memref<1x256xf32, #tpu.memory_space<vmem>>
      tpu.wait_dma2 semaphore(%arg10 : memref<!tpu.dma_semaphore, #tpu.memory_space<semaphore_mem>>) src(%147 : memref<1x256xf32, #tpu.memory_space<any>>) dst(%149 : memref<1x256xf32, #tpu.memory_space<vmem>>)
      %c0_i32_183 = arith.constant 0 : i32
      %c0_i32_184 = arith.constant 0 : i32
      %150 = tpu.memref_slice %arg2[%60, %c0_i32_184] : memref<1000x256xf32, #tpu.memory_space<any>> -> memref<1x256xf32, #tpu.memory_space<any>>
      %c1_i32_185 = arith.constant 1 : i32
      %c0_i32_186 = arith.constant 0 : i32
      %151 = tpu.memref_slice %arg6[%c0_i32_183, %c1_i32_185, %c0_i32_186] : memref<6x8x256xf32, #tpu.memory_space<vmem>> -> memref<1x1x256xf32, #tpu.memory_space<vmem>>
      %152 = tpu.memref_squeeze %151 : memref<1x1x256xf32, #tpu.memory_space<vmem>> -> memref<1x256xf32, #tpu.memory_space<vmem>>
      tpu.wait_dma2 semaphore(%arg10 : memref<!tpu.dma_semaphore, #tpu.memory_space<semaphore_mem>>) src(%150 : memref<1x256xf32, #tpu.memory_space<any>>) dst(%152 : memref<1x256xf32, #tpu.memory_space<vmem>>)
      %c1_i32_187 = arith.constant 1 : i32
      %c0_i32_188 = arith.constant 0 : i32
      %153 = tpu.memref_slice %arg2[%64, %c0_i32_188] : memref<1000x256xf32, #tpu.memory_space<any>> -> memref<1x256xf32, #tpu.memory_space<any>>
      %c1_i32_189 = arith.constant 1 : i32
      %c0_i32_190 = arith.constant 0 : i32
      %154 = tpu.memref_slice %arg6[%c1_i32_187, %c1_i32_189, %c0_i32_190] : memref<6x8x256xf32, #tpu.memory_space<vmem>> -> memref<1x1x256xf32, #tpu.memory_space<vmem>>
      %155 = tpu.memref_squeeze %154 : memref<1x1x256xf32, #tpu.memory_space<vmem>> -> memref<1x256xf32, #tpu.memory_space<vmem>>
      tpu.wait_dma2 semaphore(%arg10 : memref<!tpu.dma_semaphore, #tpu.memory_space<semaphore_mem>>) src(%153 : memref<1x256xf32, #tpu.memory_space<any>>) dst(%155 : memref<1x256xf32, #tpu.memory_space<vmem>>)
      %c2_i32_191 = arith.constant 2 : i32
      %c0_i32_192 = arith.constant 0 : i32
      %156 = tpu.memref_slice %arg2[%68, %c0_i32_192] : memref<1000x256xf32, #tpu.memory_space<any>> -> memref<1x256xf32, #tpu.memory_space<any>>
      %c1_i32_193 = arith.constant 1 : i32
      %c0_i32_194 = arith.constant 0 : i32
      %157 = tpu.memref_slice %arg6[%c2_i32_191, %c1_i32_193, %c0_i32_194] : memref<6x8x256xf32, #tpu.memory_space<vmem>> -> memref<1x1x256xf32, #tpu.memory_space<vmem>>
      %158 = tpu.memref_squeeze %157 : memref<1x1x256xf32, #tpu.memory_space<vmem>> -> memref<1x256xf32, #tpu.memory_space<vmem>>
      tpu.wait_dma2 semaphore(%arg10 : memref<!tpu.dma_semaphore, #tpu.memory_space<semaphore_mem>>) src(%156 : memref<1x256xf32, #tpu.memory_space<any>>) dst(%158 : memref<1x256xf32, #tpu.memory_space<vmem>>)
      %c3_i32_195 = arith.constant 3 : i32
      %c0_i32_196 = arith.constant 0 : i32
      %159 = tpu.memref_slice %arg2[%72, %c0_i32_196] : memref<1000x256xf32, #tpu.memory_space<any>> -> memref<1x256xf32, #tpu.memory_space<any>>
      %c1_i32_197 = arith.constant 1 : i32
      %c0_i32_198 = arith.constant 0 : i32
      %160 = tpu.memref_slice %arg6[%c3_i32_195, %c1_i32_197, %c0_i32_198] : memref<6x8x256xf32, #tpu.memory_space<vmem>> -> memref<1x1x256xf32, #tpu.memory_space<vmem>>
      %161 = tpu.memref_squeeze %160 : memref<1x1x256xf32, #tpu.memory_space<vmem>> -> memref<1x256xf32, #tpu.memory_space<vmem>>
      tpu.wait_dma2 semaphore(%arg10 : memref<!tpu.dma_semaphore, #tpu.memory_space<semaphore_mem>>) src(%159 : memref<1x256xf32, #tpu.memory_space<any>>) dst(%161 : memref<1x256xf32, #tpu.memory_space<vmem>>)
      %c4_i32_199 = arith.constant 4 : i32
      %c0_i32_200 = arith.constant 0 : i32
      %162 = tpu.memref_slice %arg2[%76, %c0_i32_200] : memref<1000x256xf32, #tpu.memory_space<any>> -> memref<1x256xf32, #tpu.memory_space<any>>
      %c1_i32_201 = arith.constant 1 : i32
      %c0_i32_202 = arith.constant 0 : i32
      %163 = tpu.memref_slice %arg6[%c4_i32_199, %c1_i32_201, %c0_i32_202] : memref<6x8x256xf32, #tpu.memory_space<vmem>> -> memref<1x1x256xf32, #tpu.memory_space<vmem>>
      %164 = tpu.memref_squeeze %163 : memref<1x1x256xf32, #tpu.memory_space<vmem>> -> memref<1x256xf32, #tpu.memory_space<vmem>>
      tpu.wait_dma2 semaphore(%arg10 : memref<!tpu.dma_semaphore, #tpu.memory_space<semaphore_mem>>) src(%162 : memref<1x256xf32, #tpu.memory_space<any>>) dst(%164 : memref<1x256xf32, #tpu.memory_space<vmem>>)
      %c5_i32_203 = arith.constant 5 : i32
      %c0_i32_204 = arith.constant 0 : i32
      %165 = tpu.memref_slice %arg2[%80, %c0_i32_204] : memref<1000x256xf32, #tpu.memory_space<any>> -> memref<1x256xf32, #tpu.memory_space<any>>
      %c1_i32_205 = arith.constant 1 : i32
      %c0_i32_206 = arith.constant 0 : i32
      %166 = tpu.memref_slice %arg6[%c5_i32_203, %c1_i32_205, %c0_i32_206] : memref<6x8x256xf32, #tpu.memory_space<vmem>> -> memref<1x1x256xf32, #tpu.memory_space<vmem>>
      %167 = tpu.memref_squeeze %166 : memref<1x1x256xf32, #tpu.memory_space<vmem>> -> memref<1x256xf32, #tpu.memory_space<vmem>>
      tpu.wait_dma2 semaphore(%arg10 : memref<!tpu.dma_semaphore, #tpu.memory_space<semaphore_mem>>) src(%165 : memref<1x256xf32, #tpu.memory_space<any>>) dst(%167 : memref<1x256xf32, #tpu.memory_space<vmem>>)
      %c0_i32_207 = arith.constant 0 : i32
      %c0_i32_208 = arith.constant 0 : i32
      %168 = tpu.memref_slice %arg2[%84, %c0_i32_208] : memref<1000x256xf32, #tpu.memory_space<any>> -> memref<1x256xf32, #tpu.memory_space<any>>
      %c2_i32_209 = arith.constant 2 : i32
      %c0_i32_210 = arith.constant 0 : i32
      %169 = tpu.memref_slice %arg6[%c0_i32_207, %c2_i32_209, %c0_i32_210] : memref<6x8x256xf32, #tpu.memory_space<vmem>> -> memref<1x1x256xf32, #tpu.memory_space<vmem>>
      %170 = tpu.memref_squeeze %169 : memref<1x1x256xf32, #tpu.memory_space<vmem>> -> memref<1x256xf32, #tpu.memory_space<vmem>>
      tpu.wait_dma2 semaphore(%arg10 : memref<!tpu.dma_semaphore, #tpu.memory_space<semaphore_mem>>) src(%168 : memref<1x256xf32, #tpu.memory_space<any>>) dst(%170 : memref<1x256xf32, #tpu.memory_space<vmem>>)
      %c1_i32_211 = arith.constant 1 : i32
      %c0_i32_212 = arith.constant 0 : i32
      %171 = tpu.memref_slice %arg2[%88, %c0_i32_212] : memref<1000x256xf32, #tpu.memory_space<any>> -> memref<1x256xf32, #tpu.memory_space<any>>
      %c2_i32_213 = arith.constant 2 : i32
      %c0_i32_214 = arith.constant 0 : i32
      %172 = tpu.memref_slice %arg6[%c1_i32_211, %c2_i32_213, %c0_i32_214] : memref<6x8x256xf32, #tpu.memory_space<vmem>> -> memref<1x1x256xf32, #tpu.memory_space<vmem>>
      %173 = tpu.memref_squeeze %172 : memref<1x1x256xf32, #tpu.memory_space<vmem>> -> memref<1x256xf32, #tpu.memory_space<vmem>>
      tpu.wait_dma2 semaphore(%arg10 : memref<!tpu.dma_semaphore, #tpu.memory_space<semaphore_mem>>) src(%171 : memref<1x256xf32, #tpu.memory_space<any>>) dst(%173 : memref<1x256xf32, #tpu.memory_space<vmem>>)
      %c2_i32_215 = arith.constant 2 : i32
      %c0_i32_216 = arith.constant 0 : i32
      %174 = tpu.memref_slice %arg2[%92, %c0_i32_216] : memref<1000x256xf32, #tpu.memory_space<any>> -> memref<1x256xf32, #tpu.memory_space<any>>
      %c2_i32_217 = arith.constant 2 : i32
      %c0_i32_218 = arith.constant 0 : i32
      %175 = tpu.memref_slice %arg6[%c2_i32_215, %c2_i32_217, %c0_i32_218] : memref<6x8x256xf32, #tpu.memory_space<vmem>> -> memref<1x1x256xf32, #tpu.memory_space<vmem>>
      %176 = tpu.memref_squeeze %175 : memref<1x1x256xf32, #tpu.memory_space<vmem>> -> memref<1x256xf32, #tpu.memory_space<vmem>>
      tpu.wait_dma2 semaphore(%arg10 : memref<!tpu.dma_semaphore, #tpu.memory_space<semaphore_mem>>) src(%174 : memref<1x256xf32, #tpu.memory_space<any>>) dst(%176 : memref<1x256xf32, #tpu.memory_space<vmem>>)
      %c3_i32_219 = arith.constant 3 : i32
      %c0_i32_220 = arith.constant 0 : i32
      %177 = tpu.memref_slice %arg2[%96, %c0_i32_220] : memref<1000x256xf32, #tpu.memory_space<any>> -> memref<1x256xf32, #tpu.memory_space<any>>
      %c2_i32_221 = arith.constant 2 : i32
      %c0_i32_222 = arith.constant 0 : i32
      %178 = tpu.memref_slice %arg6[%c3_i32_219, %c2_i32_221, %c0_i32_222] : memref<6x8x256xf32, #tpu.memory_space<vmem>> -> memref<1x1x256xf32, #tpu.memory_space<vmem>>
      %179 = tpu.memref_squeeze %178 : memref<1x1x256xf32, #tpu.memory_space<vmem>> -> memref<1x256xf32, #tpu.memory_space<vmem>>
      tpu.wait_dma2 semaphore(%arg10 : memref<!tpu.dma_semaphore, #tpu.memory_space<semaphore_mem>>) src(%177 : memref<1x256xf32, #tpu.memory_space<any>>) dst(%179 : memref<1x256xf32, #tpu.memory_space<vmem>>)
      %c4_i32_223 = arith.constant 4 : i32
      %c0_i32_224 = arith.constant 0 : i32
      %180 = tpu.memref_slice %arg2[%100, %c0_i32_224] : memref<1000x256xf32, #tpu.memory_space<any>> -> memref<1x256xf32, #tpu.memory_space<any>>
      %c2_i32_225 = arith.constant 2 : i32
      %c0_i32_226 = arith.constant 0 : i32
      %181 = tpu.memref_slice %arg6[%c4_i32_223, %c2_i32_225, %c0_i32_226] : memref<6x8x256xf32, #tpu.memory_space<vmem>> -> memref<1x1x256xf32, #tpu.memory_space<vmem>>
      %182 = tpu.memref_squeeze %181 : memref<1x1x256xf32, #tpu.memory_space<vmem>> -> memref<1x256xf32, #tpu.memory_space<vmem>>
      tpu.wait_dma2 semaphore(%arg10 : memref<!tpu.dma_semaphore, #tpu.memory_space<semaphore_mem>>) src(%180 : memref<1x256xf32, #tpu.memory_space<any>>) dst(%182 : memref<1x256xf32, #tpu.memory_space<vmem>>)
      %c5_i32_227 = arith.constant 5 : i32
      %c0_i32_228 = arith.constant 0 : i32
      %183 = tpu.memref_slice %arg2[%104, %c0_i32_228] : memref<1000x256xf32, #tpu.memory_space<any>> -> memref<1x256xf32, #tpu.memory_space<any>>
      %c2_i32_229 = arith.constant 2 : i32
      %c0_i32_230 = arith.constant 0 : i32
      %184 = tpu.memref_slice %arg6[%c5_i32_227, %c2_i32_229, %c0_i32_230] : memref<6x8x256xf32, #tpu.memory_space<vmem>> -> memref<1x1x256xf32, #tpu.memory_space<vmem>>
      %185 = tpu.memref_squeeze %184 : memref<1x1x256xf32, #tpu.memory_space<vmem>> -> memref<1x256xf32, #tpu.memory_space<vmem>>
      tpu.wait_dma2 semaphore(%arg10 : memref<!tpu.dma_semaphore, #tpu.memory_space<semaphore_mem>>) src(%183 : memref<1x256xf32, #tpu.memory_space<any>>) dst(%185 : memref<1x256xf32, #tpu.memory_space<vmem>>)
      %c0_i32_231 = arith.constant 0 : i32
      %c0_i32_232 = arith.constant 0 : i32
      %186 = tpu.memref_slice %arg2[%108, %c0_i32_232] : memref<1000x256xf32, #tpu.memory_space<any>> -> memref<1x256xf32, #tpu.memory_space<any>>
      %c3_i32_233 = arith.constant 3 : i32
      %c0_i32_234 = arith.constant 0 : i32
      %187 = tpu.memref_slice %arg6[%c0_i32_231, %c3_i32_233, %c0_i32_234] : memref<6x8x256xf32, #tpu.memory_space<vmem>> -> memref<1x1x256xf32, #tpu.memory_space<vmem>>
      %188 = tpu.memref_squeeze %187 : memref<1x1x256xf32, #tpu.memory_space<vmem>> -> memref<1x256xf32, #tpu.memory_space<vmem>>
      tpu.wait_dma2 semaphore(%arg10 : memref<!tpu.dma_semaphore, #tpu.memory_space<semaphore_mem>>) src(%186 : memref<1x256xf32, #tpu.memory_space<any>>) dst(%188 : memref<1x256xf32, #tpu.memory_space<vmem>>)
      %c1_i32_235 = arith.constant 1 : i32
      %c0_i32_236 = arith.constant 0 : i32
      %189 = tpu.memref_slice %arg2[%112, %c0_i32_236] : memref<1000x256xf32, #tpu.memory_space<any>> -> memref<1x256xf32, #tpu.memory_space<any>>
      %c3_i32_237 = arith.constant 3 : i32
      %c0_i32_238 = arith.constant 0 : i32
      %190 = tpu.memref_slice %arg6[%c1_i32_235, %c3_i32_237, %c0_i32_238] : memref<6x8x256xf32, #tpu.memory_space<vmem>> -> memref<1x1x256xf32, #tpu.memory_space<vmem>>
      %191 = tpu.memref_squeeze %190 : memref<1x1x256xf32, #tpu.memory_space<vmem>> -> memref<1x256xf32, #tpu.memory_space<vmem>>
      tpu.wait_dma2 semaphore(%arg10 : memref<!tpu.dma_semaphore, #tpu.memory_space<semaphore_mem>>) src(%189 : memref<1x256xf32, #tpu.memory_space<any>>) dst(%191 : memref<1x256xf32, #tpu.memory_space<vmem>>)
      %c2_i32_239 = arith.constant 2 : i32
      %c0_i32_240 = arith.constant 0 : i32
      %192 = tpu.memref_slice %arg2[%116, %c0_i32_240] : memref<1000x256xf32, #tpu.memory_space<any>> -> memref<1x256xf32, #tpu.memory_space<any>>
      %c3_i32_241 = arith.constant 3 : i32
      %c0_i32_242 = arith.constant 0 : i32
      %193 = tpu.memref_slice %arg6[%c2_i32_239, %c3_i32_241, %c0_i32_242] : memref<6x8x256xf32, #tpu.memory_space<vmem>> -> memref<1x1x256xf32, #tpu.memory_space<vmem>>
      %194 = tpu.memref_squeeze %193 : memref<1x1x256xf32, #tpu.memory_space<vmem>> -> memref<1x256xf32, #tpu.memory_space<vmem>>
      tpu.wait_dma2 semaphore(%arg10 : memref<!tpu.dma_semaphore, #tpu.memory_space<semaphore_mem>>) src(%192 : memref<1x256xf32, #tpu.memory_space<any>>) dst(%194 : memref<1x256xf32, #tpu.memory_space<vmem>>)
      %c3_i32_243 = arith.constant 3 : i32
      %c0_i32_244 = arith.constant 0 : i32
      %195 = tpu.memref_slice %arg2[%120, %c0_i32_244] : memref<1000x256xf32, #tpu.memory_space<any>> -> memref<1x256xf32, #tpu.memory_space<any>>
      %c3_i32_245 = arith.constant 3 : i32
      %c0_i32_246 = arith.constant 0 : i32
      %196 = tpu.memref_slice %arg6[%c3_i32_243, %c3_i32_245, %c0_i32_246] : memref<6x8x256xf32, #tpu.memory_space<vmem>> -> memref<1x1x256xf32, #tpu.memory_space<vmem>>
      %197 = tpu.memref_squeeze %196 : memref<1x1x256xf32, #tpu.memory_space<vmem>> -> memref<1x256xf32, #tpu.memory_space<vmem>>
      tpu.wait_dma2 semaphore(%arg10 : memref<!tpu.dma_semaphore, #tpu.memory_space<semaphore_mem>>) src(%195 : memref<1x256xf32, #tpu.memory_space<any>>) dst(%197 : memref<1x256xf32, #tpu.memory_space<vmem>>)
      %c4_i32_247 = arith.constant 4 : i32
      %c0_i32_248 = arith.constant 0 : i32
      %198 = tpu.memref_slice %arg2[%124, %c0_i32_248] : memref<1000x256xf32, #tpu.memory_space<any>> -> memref<1x256xf32, #tpu.memory_space<any>>
      %c3_i32_249 = arith.constant 3 : i32
      %c0_i32_250 = arith.constant 0 : i32
      %199 = tpu.memref_slice %arg6[%c4_i32_247, %c3_i32_249, %c0_i32_250] : memref<6x8x256xf32, #tpu.memory_space<vmem>> -> memref<1x1x256xf32, #tpu.memory_space<vmem>>
      %200 = tpu.memref_squeeze %199 : memref<1x1x256xf32, #tpu.memory_space<vmem>> -> memref<1x256xf32, #tpu.memory_space<vmem>>
      tpu.wait_dma2 semaphore(%arg10 : memref<!tpu.dma_semaphore, #tpu.memory_space<semaphore_mem>>) src(%198 : memref<1x256xf32, #tpu.memory_space<any>>) dst(%200 : memref<1x256xf32, #tpu.memory_space<vmem>>)
      %c5_i32_251 = arith.constant 5 : i32
      %c0_i32_252 = arith.constant 0 : i32
      %201 = tpu.memref_slice %arg2[%128, %c0_i32_252] : memref<1000x256xf32, #tpu.memory_space<any>> -> memref<1x256xf32, #tpu.memory_space<any>>
      %c3_i32_253 = arith.constant 3 : i32
      %c0_i32_254 = arith.constant 0 : i32
      %202 = tpu.memref_slice %arg6[%c5_i32_251, %c3_i32_253, %c0_i32_254] : memref<6x8x256xf32, #tpu.memory_space<vmem>> -> memref<1x1x256xf32, #tpu.memory_space<vmem>>
      %203 = tpu.memref_squeeze %202 : memref<1x1x256xf32, #tpu.memory_space<vmem>> -> memref<1x256xf32, #tpu.memory_space<vmem>>
      tpu.wait_dma2 semaphore(%arg10 : memref<!tpu.dma_semaphore, #tpu.memory_space<semaphore_mem>>) src(%201 : memref<1x256xf32, #tpu.memory_space<any>>) dst(%203 : memref<1x256xf32, #tpu.memory_space<vmem>>)
      %cst_255 = arith.constant 0.000000e+00 : f32
      %204 = vector.broadcast %cst_255 : f32 to vector<6x4x256xf32>
      %c0_256 = arith.constant 0 : index
      %c4_257 = arith.constant 4 : index
      %c0_258 = arith.constant 0 : index
      %205 = vector.load %arg6[%c0_256, %c4_257, %c0_258] : memref<6x8x256xf32, #tpu.memory_space<vmem>>, vector<6x4x256xf32>
      tpu.vector_store %arg6[%c0_256, %c4_257, %c0_258], %204 {strides = array<i32>} : memref<6x8x256xf32, #tpu.memory_space<vmem>>, vector<6x4x256xf32>,
      %c0_259 = arith.constant 0 : index
      %c0_260 = arith.constant 0 : index
      %c0_261 = arith.constant 0 : index
      %206 = vector.load %arg6[%c0_259, %c0_260, %c0_261] : memref<6x8x256xf32, #tpu.memory_space<vmem>>, vector<6x8x256xf32>
      %cst_262 = arith.constant dense<0.000000e+00> : vector<8x256xf32>
      %207 = vector.multi_reduction <add>, %206, %cst_262 [0] : vector<6x8x256xf32> to vector<8x256xf32>
      %208 = arith.truncf %207 : vector<8x256xf32> to vector<8x256xbf16>
      %c0_263 = arith.constant 0 : index
      %c0_264 = arith.constant 0 : index
      %209 = vector.load %arg7[%c0_263, %c0_264] : memref<8x256xbf16, #tpu.memory_space<vmem>>, vector<8x256xbf16>
      tpu.vector_store %arg7[%c0_263, %c0_264], %208 {strides = array<i32>} : memref<8x256xbf16, #tpu.memory_space<vmem>>, vector<8x256xbf16>,
    } else {
    }
    %c0 = arith.constant 0 : index
    %c0_1 = arith.constant 0 : index
    %3 = vector.load %arg7[%c0, %c0_1] : memref<8x256xbf16, #tpu.memory_space<vmem>>, vector<8x256xbf16>
    %c0_2 = arith.constant 0 : index
    %c0_3 = arith.constant 0 : index
    %4 = vector.load %arg3[%c0_2, %c0_3] : memref<256x256xbf16, #tpu.memory_space<vmem>>, vector<256x256xbf16>
    %cst = arith.constant dense<0.000000e+00> : vector<8x256xf32>
    %5 = tpu.matmul %3, %4, %cst {dimension_numbers = #tpu.dot_dimension_numbers<[1], [1], [0], [0], [0, 0, 1, 0], [], []>} : vector<8x256xbf16>, vector<256x256xbf16>, vector<8x256xf32> -> vector<8x256xf32>
    %c0_4 = arith.constant 0 : index
    %c0_5 = arith.constant 0 : index
    %6 = vector.load %arg4[%c0_4, %c0_5] : memref<1x256xf32, #tpu.memory_space<vmem>>, vector<1x256xf32>
    %7 = vector.broadcast %6 : vector<1x256xf32> to vector<8x256xf32>
    %8 = arith.addf %5, %7 : vector<8x256xf32>
    %c256_i32 = arith.constant 256 : i32
    %9 = arith.muli %arg0, %c256_i32 : i32
    %10 = tpu.assume_multiple %9, 256 : i32
    %c0_6 = arith.constant 0 : index
    %11 = arith.index_cast %10 : i32 to index
    %12 = vector.load %arg5[%c0_6, %11] : memref<8x1024xf32, #tpu.memory_space<vmem>>, vector<8x256xf32>
    tpu.vector_store %arg5[%c0_6, %11], %8 {strides = array<i32>} : memref<8x1024xf32, #tpu.memory_space<vmem>>, vector<8x256xf32>,
    %c0_7 = arith.constant 0 : index
    %c0_8 = arith.constant 0 : index
    %13 = vector.load %arg8[%c0_7, %c0_8] : memref<8x1xf32, #tpu.memory_space<vmem>>, vector<8x1xf32>
    %cst_9 = arith.constant dense<0xFF800000> : vector<8xf32>
    %14 = vector.multi_reduction <maximumf>, %8, %cst_9 [1] : vector<8x256xf32> to vector<8xf32>
    %15 = vector.shape_cast %14 : vector<8xf32> to vector<8x1xf32>
    %16 = arith.maximumf %13, %15 : vector<8x1xf32>
    %c0_10 = arith.constant 0 : index
    %c0_11 = arith.constant 0 : index
    %17 = vector.load %arg9[%c0_10, %c0_11] : memref<8x1xf32, #tpu.memory_space<vmem>>, vector<8x1xf32>
    %18 = arith.subf %13, %16 : vector<8x1xf32>
    %19 = math.exp %18 : vector<8x1xf32>
    %20 = arith.mulf %17, %19 : vector<8x1xf32>
    %21 = vector.broadcast %16 : vector<8x1xf32> to vector<8x256xf32>
    %22 = arith.subf %8, %21 : vector<8x256xf32>
    %23 = math.exp %22 : vector<8x256xf32>
    %cst_12 = arith.constant dense<0.000000e+00> : vector<8xf32>
    %24 = vector.multi_reduction <add>, %23, %cst_12 [1] : vector<8x256xf32> to vector<8xf32>
    %25 = vector.shape_cast %24 : vector<8xf32> to vector<8x1xf32>
    %26 = arith.addf %20, %25 : vector<8x1xf32>
    %c0_13 = arith.constant 0 : index
    %c0_14 = arith.constant 0 : index
    %27 = vector.load %arg9[%c0_13, %c0_14] : memref<8x1xf32, #tpu.memory_space<vmem>>, vector<8x1xf32>
    tpu.vector_store %arg9[%c0_13, %c0_14], %26 {strides = array<i32>} : memref<8x1xf32, #tpu.memory_space<vmem>>, vector<8x1xf32>,
    %c0_15 = arith.constant 0 : index
    %c0_16 = arith.constant 0 : index
    %28 = vector.load %arg8[%c0_15, %c0_16] : memref<8x1xf32, #tpu.memory_space<vmem>>, vector<8x1xf32>
    tpu.vector_store %arg8[%c0_15, %c0_16], %16 {strides = array<i32>} : memref<8x1xf32, #tpu.memory_space<vmem>>, vector<8x1xf32>,
    %c3_i32 = arith.constant 3 : i32
    %29 = arith.cmpi eq, %arg0, %c3_i32 : i32
    %30 = arith.extui %29 : i1 to i32
    %c0_i32_17 = arith.constant 0 : i32
    %31 = arith.cmpi ne, %30, %c0_i32_17 : i32
    scf.if %31 {
      %c0_18 = arith.constant 0 : index
      %c0_19 = arith.constant 0 : index
      %32 = vector.load %arg8[%c0_18, %c0_19] : memref<8x1xf32, #tpu.memory_space<vmem>>, vector<8x1xf32>
      %c0_20 = arith.constant 0 : index
      %c0_21 = arith.constant 0 : index
      %33 = vector.load %arg9[%c0_20, %c0_21] : memref<8x1xf32, #tpu.memory_space<vmem>>, vector<8x1xf32>
      %34 = math.log %33 : vector<8x1xf32>
      %35 = arith.addf %32, %34 : vector<8x1xf32>
      %c0_22 = arith.constant 0 : index
      %c0_23 = arith.constant 0 : index
      %36 = vector.load %arg5[%c0_22, %c0_23] : memref<8x1024xf32, #tpu.memory_space<vmem>>, vector<8x1024xf32>
      %37 = vector.broadcast %35 : vector<8x1xf32> to vector<8x1024xf32>
      %38 = arith.subf %36, %37 : vector<8x1024xf32>
      %c0_24 = arith.constant 0 : index
      %c0_25 = arith.constant 0 : index
      %39 = vector.load %arg5[%c0_24, %c0_25] : memref<8x1024xf32, #tpu.memory_space<vmem>>, vector<8x1024xf32>
      tpu.vector_store %arg5[%c0_24, %c0_25], %38 {strides = array<i32>} : memref<8x1024xf32, #tpu.memory_space<vmem>>, vector<8x1024xf32>,
    } else {
    }
    return
  }
  func.func @transform_1(%arg0: i32, %arg1: memref<4x6xi32, #tpu.memory_space<smem>>) -> (i32, i32) {
    %c0_i32 = arith.constant 0 : i32
    %c0_i32_0 = arith.constant 0 : i32
    return %arg0, %c0_i32 : i32, i32
  }
  func.func @transform_2(%arg0: i32, %arg1: memref<4x6xi32, #tpu.memory_space<smem>>) -> (i32, i32) {
    %c0_i32 = arith.constant 0 : i32
    %c0_i32_0 = arith.constant 0 : i32
    return %c0_i32, %arg0 : i32, i32
  }
  func.func @transform_3(%arg0: i32, %arg1: memref<4x6xi32, #tpu.memory_space<smem>>) -> (i32, i32) {
    %c0_i32 = arith.constant 0 : i32
    %c0_i32_0 = arith.constant 0 : i32
    %c0_i32_1 = arith.constant 0 : i32
    return %c0_i32, %c0_i32_0 : i32, i32
  }
}

</mosaic_0001>

<llo_original>
// kernel: cbow_forward.1
$region0: #{cbow_forward.1}
  #allocation0 [shape = 'u32[]', space=smem, size = 0x4, offset = 0x4, fixed_abs, tag = 'smem constant byte address 0x4 - core index']
  #allocation1 [shape = 'u32[144,128]{1,0:T(1,128)}', space=vmem, size = 0x12000, scoped, tag = 'internal scratch']
  #allocation2 [shape = 'f32[6,8,256]{2,1,0:T(8,128)}', space=vmem, size = 0xc000, scoped, tag = 'scratch operand']
  #allocation3 [shape = 'bf16[8,256]{1,0:T(8,128)(2,1)}', space=vmem, size = 0x1000, scoped, tag = 'scratch operand']
  #allocation4 [shape = 'f32[8,1]{1,0:T(8,128)}', space=vmem, size = 0x1000, scoped, tag = 'scratch operand']
  #allocation5 [shape = 'f32[8,1]{1,0:T(8,128)}', space=vmem, size = 0x1000, scoped, tag = 'scratch operand']
  #allocation6 [shape = 's32[1]{0}', space=sflag, size = 0x4, scoped, tag = 'scratch operand']
  #allocation7 [shape = 's32[1]{0}', space=sflag, size = 0x4, scoped, tag = 'scoped memory for cbow_forward.1']
  #allocation8 [shape = 'u8[2048]{0}', space=smem, size = 0x800, scoped, tag = 'prefetched SMEM operand 0']
  #allocation11 [shape = 's32[]', space=sflag, size = 0x4, offset = 0, fixed_abs, tag = 'sflag constant byte address 0x0 - dummy sync flag']
  #allocation12 [shape = 's32[]', space=sflag, size = 0x4, offset = 0, fixed_abs, tag = 'sflag constant byte address 0x0 - dummy sync flag']
  #allocation13 [shape = 's32[]', space=sflag, size = 0x4, offset = 0, fixed_abs, tag = 'sflag constant byte address 0x0 - dummy sync flag']
  #allocation14 [shape = 's32[]', space=sflag, size = 0x4, offset = 0, fixed_abs, tag = 'sflag constant byte address 0x0 - dummy sync flag']
  #allocation15 [shape = 's32[]', space=sflag, size = 0x4, offset = 0, fixed_abs, tag = 'sflag constant byte address 0x0 - dummy sync flag']
  #allocation16 [shape = 's32[]', space=sflag, size = 0x4, offset = 0, fixed_abs, tag = 'sflag constant byte address 0x0 - dummy sync flag']
  #allocation17 [shape = 's32[]', space=sflag, size = 0x4, offset = 0, fixed_abs, tag = 'sflag constant byte address 0x0 - dummy sync flag']
  #allocation18 [shape = 's32[]', space=sflag, size = 0x4, offset = 0, fixed_abs, tag = 'sflag constant byte address 0x0 - dummy sync flag']
  #allocation19 [shape = 's32[]', space=sflag, size = 0x4, offset = 0, fixed_abs, tag = 'sflag constant byte address 0x0 - dummy sync flag']
  #allocation20 [shape = 's32[]', space=sflag, size = 0x4, offset = 0, fixed_abs, tag = 'sflag constant byte address 0x0 - dummy sync flag']
  #allocation21 [shape = 's32[]', space=sflag, size = 0x4, offset = 0, fixed_abs, tag = 'sflag constant byte address 0x0 - dummy sync flag']
  #allocation22 [shape = 's32[]', space=sflag, size = 0x4, offset = 0, fixed_abs, tag = 'sflag constant byte address 0x0 - dummy sync flag']
  #allocation23 [shape = 's32[]', space=sflag, size = 0x4, offset = 0, fixed_abs, tag = 'sflag constant byte address 0x0 - dummy sync flag']
  #allocation24 [shape = 's32[]', space=sflag, size = 0x4, offset = 0, fixed_abs, tag = 'sflag constant byte address 0x0 - dummy sync flag']
  #allocation25 [shape = 's32[]', space=sflag, size = 0x4, offset = 0, fixed_abs, tag = 'sflag constant byte address 0x0 - dummy sync flag']
  #allocation26 [shape = 's32[]', space=sflag, size = 0x4, offset = 0, fixed_abs, tag = 'sflag constant byte address 0x0 - dummy sync flag']
  #allocation27 [shape = 's32[]', space=sflag, size = 0x4, offset = 0, fixed_abs, tag = 'sflag constant byte address 0x0 - dummy sync flag']
  #allocation28 [shape = 's32[]', space=sflag, size = 0x4, offset = 0, fixed_abs, tag = 'sflag constant byte address 0x0 - dummy sync flag']
  #allocation29 [shape = 's32[]', space=sflag, size = 0x4, offset = 0, fixed_abs, tag = 'sflag constant byte address 0x0 - dummy sync flag']
  #allocation30 [shape = 's32[]', space=sflag, size = 0x4, offset = 0, fixed_abs, tag = 'sflag constant byte address 0x0 - dummy sync flag']
  #allocation31 [shape = 's32[]', space=sflag, size = 0x4, offset = 0, fixed_abs, tag = 'sflag constant byte address 0x0 - dummy sync flag']
  #allocation32 [shape = 's32[]', space=sflag, size = 0x4, offset = 0, fixed_abs, tag = 'sflag constant byte address 0x0 - dummy sync flag']
  #allocation33 [shape = 's32[]', space=sflag, size = 0x4, offset = 0, fixed_abs, tag = 'sflag constant byte address 0x0 - dummy sync flag']
  #allocation34 [shape = 's32[]', space=sflag, size = 0x4, offset = 0, fixed_abs, tag = 'sflag constant byte address 0x0 - dummy sync flag']
  %s0 = inlined_call_operand.hbm [shape: s32[4,6], index: 0, kind: input, shape index: {}]
  %s1 = inlined_call_operand.hbm [shape: f32[1000,256], index: 1, kind: input, shape index: {}]
  %s2 = inlined_call_operand.hbm [shape: bf16[1024,256], index: 2, kind: input, shape index: {}]
  %s3 = inlined_call_operand.vmem [shape: f32[1,1024], index: 3, kind: input, shape index: {}]
  %s4 = inlined_call_operand.vmem [shape: f32[8,1024], index: 4, kind: output, shape index: {}]
  %s5 = sld [smem:[#allocation0]]
  $region53: #{cbow_forward.1} parent=0
    _
  %s7 = ssub.s32 1, %s5
  %s8 = scalar_select 0, %s7, %s5
  %10 = dma.hbm_to_smem %s0, 64, [#allocation8], [#allocation7]
  %11 = dma.done [#allocation7], 64
  %12 = sfence
  $region1: #{cbow_forward.1} parent=0
    #allocation9 [shape = 'u8[262144]{0}', space=vmem, size = 0x40000, scoped, tag = 'input window, operand 2']
    #allocation10 [shape = 's32[2]{0}', space=sflag, size = 0x8, scoped, tag = 'scoped memory for cbow_forward.1']
    %13 = vsyncpa [#allocation10], 0
    %s14 = scalar_lea.sflag [#allocation10], 1
    %15 = vsyncpa %s14, 0
    loop: start=0, step=1, limit=6
    $region2: #{cbow_forward.1} parent=1 // loop_pre_header
      _
    $region3: #{cbow_forward.1} parent=1 // loop_header
      %s17 = sphi 0, %s21
      %p18 = scmp.ge.s32.totalorder %s17, 6
      %s27 = sphi 0, %s29
      %s30 = sphi 0, %s27
      %s31 = sphi 0, %s30
      %s47 = sphi 0, %s31
      %s53 = sphi 0, %s55
      %s56 = sphi 0, %s53
      %s57 = sphi 0, %s56
      %s73 = sphi 0, %s57
      %s77 = sphi 0, %s77
      %s79 = sphi 0, %s77
      %s80 = sphi 0, %s79
      %s94 = sphi 0, %s80
    $region4: #{cbow_forward.1} parent=1 // loop_header_branch
      %20 = sbr.rel (%p18) target = $region8
    $region5: #{cbow_forward.1} parent=1 // loop_body
      %s22 = ssub.s32 %s17, 1
      %s23 = ssub.s32 %s17, 2
      %s24 = sadd.s32 %s17, 1
      %s25 = ssub.s32 %s17, %s24
      %p26 = scmp.eq.s32.totalorder %s25, 0
      %s28 = sadd.s32 %s27, 1
      %s29 = scalar_select %p26, %s27, %s28
      %p32 = pneg %p26
      %p33 = scmp.eq.s32.totalorder %s17, 3
      %p34 = por %p32, %p33
      %p35 = scmp.ne.s32.totalorder %s27, %s30
      %p36 = scmp.eq.s32.totalorder %s17, 0
      %p37 = por %p35, %p36
      %p38 = scmp.ne.s32.totalorder %s27, %s30
      %p39 = scmp.eq.s32.totalorder %s22, 3
      %p40 = por %p38, %p39
      %p41 = scmp.ne.s32.totalorder %s30, %s31
      %p42 = scmp.eq.s32.totalorder %s22, 0
      %p43 = por %p41, %p42
      %p44 = scmp.ne.s32.totalorder %s30, %s31
      %p45 = scmp.eq.s32.totalorder %s23, 3
      %p46 = por %p44, %p45
      %p48 = scmp.ne.s32.totalorder %s31, %s47
      %p49 = scmp.eq.s32.totalorder %s23, 0
      %p50 = por %p48, %p49
      %s51 = ssub.s32 %s17, %s24
      %p52 = scmp.eq.s32.totalorder %s51, 0
      %s54 = sadd.s32 %s53, 1
      %s55 = scalar_select %p52, %s53, %s54
      %p58 = pneg %p52
      %p59 = scmp.eq.s32.totalorder %s17, 3
      %p60 = por %p58, %p59
      %p61 = scmp.ne.s32.totalorder %s53, %s56
      %p62 = scmp.eq.s32.totalorder %s17, 0
      %p63 = por %p61, %p62
      %p64 = scmp.ne.s32.totalorder %s53, %s56
      %p65 = scmp.eq.s32.totalorder %s22, 3
      %p66 = por %p64, %p65
      %p67 = scmp.ne.s32.totalorder %s56, %s57
      %p68 = scmp.eq.s32.totalorder %s22, 0
      %p69 = por %p67, %p68
      %p70 = scmp.ne.s32.totalorder %s56, %s57
      %p71 = scmp.eq.s32.totalorder %s23, 3
      %p72 = por %p70, %p71
      %p74 = scmp.ne.s32.totalorder %s57, %s73
      %p75 = scmp.eq.s32.totalorder %s23, 0
      %p76 = por %p74, %p75
      %s78 = sadd.s32 %s77, 1
      %p81 = scmp.eq.s32.totalorder %s17, 3
      %p82 = scmp.ne.s32.totalorder %s77, %s79
      %p83 = scmp.eq.s32.totalorder %s17, 0
      %p84 = por %p82, %p83
      %p85 = scmp.ne.s32.totalorder %s77, %s79
      %p86 = scmp.eq.s32.totalorder %s22, 3
      %p87 = por %p85, %p86
      %p88 = scmp.ne.s32.totalorder %s79, %s80
      %p89 = scmp.eq.s32.totalorder %s22, 0
      %p90 = por %p88, %p89
      %p91 = scmp.ne.s32.totalorder %s79, %s80
      %p92 = scmp.eq.s32.totalorder %s23, 3
      %p93 = por %p91, %p92
      %p95 = scmp.ne.s32.totalorder %s80, %s94
      %p96 = scmp.eq.s32.totalorder %s23, 0
      %p97 = por %p95, %p96
      %p98 = scmp.le.s32.totalorder 1, %s17
      %p99 = scmp.lt.s32.totalorder %s17, 5
      %p100 = pnand %p98, %p99
      %p101 = pneg %p100
      // Predicated region
      $region9: #{cbow_forward.1} parent=5 // pred_check
        _
      $region10: #{cbow_forward.1} parent=5 // pred_check_branch
        %103 = sbr.rel (%p100) target = $region12
      $region11: #{cbow_forward.1} parent=5 // pred_region
        %s104 = ssub.s32 %s17, 1
      $region12: #{cbow_forward.1} parent=5 // pred_fallthru
        _
      %p105 = scmp.lt.s32.totalorder %s17, 4
      // Predicated region
      $region13: #{cbow_forward.1} parent=5 // pred_check
        %p106 = pneg %p105
      $region14: #{cbow_forward.1} parent=5 // pred_check_branch
        %108 = sbr.rel (%p106) target = $region16
      $region15: #{cbow_forward.1} parent=5 // pred_region
        // Predicated region
        $region17: #{cbow_forward.1} parent=15 // pred_check
          %p109 = pneg %p37
        $region18: #{cbow_forward.1} parent=15 // pred_check_branch
          %111 = sbr.rel (%p109) target = $region20
        $region19: #{cbow_forward.1} parent=15 // pred_region
          %s112 = sand.u32 %s27, 1
          %s113 = scalar_lea.sflag [#allocation10], %s112
          %s114 = sand.u32 %s27, 1
          %s115 = smul.addr %s114, 256
          %s116 = scalar_lea.vmem [#allocation9], %s115
          %s117 = smul.u32 32, %s17
          %s119 = ssub.s32 4096, 4096
          %120 = vsyncadd %s113, %s119
          %s121 = smul.addr %s117, 2
          %s122 = smul.addr %s121, 64
          %s123 = scalar_lea.hbm %s2, %s122
          %s124 = sshll.u32 %s116, 4
          %s125 = int_to_ptr.vmem [resolvable:$true] %s124
          %130 = dma.hbm_to_vmem [thread:$0]  %s123, 4096, %s125, %s113, 128, 128, 8
        $region20: #{cbow_forward.1} parent=15 // pred_fallthru
          _
        // Predicated region
        $region21: #{cbow_forward.1} parent=15 // pred_check
          %p131 = pneg %p63
        $region22: #{cbow_forward.1} parent=15 // pred_check_branch
          %133 = sbr.rel (%p131) target = $region24
        $region23: #{cbow_forward.1} parent=15 // pred_region
          %s134 = smul.u32 2, %s17
          %p135 = scmp.lt.s32.totalorder %s134, 7
          %s136 = scalar_select %p135, %s134, 7
          %s137 = scalar_lea.vmem %s3, %s136
          %s138 = smul.u32 2, %s17
        $region24: #{cbow_forward.1} parent=15 // pred_fallthru
          _
      $region16: #{cbow_forward.1} parent=5 // pred_fallthru
        _
      %p139 = scmp.le.s32.totalorder 1, %s17
      %p140 = scmp.lt.s32.totalorder %s17, 5
      %p141 = pnand %p139, %p140
      %p142 = pneg %p141
      // Predicated region
      $region25: #{cbow_forward.1} parent=5 // pred_check
        _
      $region26: #{cbow_forward.1} parent=5 // pred_check_branch
        %144 = sbr.rel (%p141) target = $region28
      $region27: #{cbow_forward.1} parent=5 // pred_region
        %s145 = ssub.s32 %s17, 1
        %s146 = sand.u32 %s30, 1
        %s147 = scalar_lea.sflag [#allocation10], %s146
        %s148 = sand.u32 %s30, 1
        %s149 = smul.addr %s148, 256
        %s150 = scalar_lea.vmem [#allocation9], %s149
        // Predicated region
        $region29: #{cbow_forward.1} parent=27 // pred_check
          %p151 = pneg %p43
        $region30: #{cbow_forward.1} parent=27 // pred_check_branch
          %153 = sbr.rel (%p151) target = $region32
        $region31: #{cbow_forward.1} parent=27 // pred_region
          %154 = dma.done %s147, 4096
        $region32: #{cbow_forward.1} parent=27 // pred_fallthru
          _
        %s155 = sand.u32 %s30, 1
        %s156 = scalar_lea.sflag [#allocation10], %s155
        %s157 = sand.u32 %s30, 1
        %s158 = smul.addr %s157, 256
        %s159 = scalar_lea.vmem [#allocation9], %s158
        %p160 = pneg %p43
        %p161 = pneg %p40
        %s162 = smul.u32 2, %s22
        %p163 = scmp.lt.s32.totalorder %s162, 7
        %s164 = scalar_select %p163, %s162, 7
        %s165 = scalar_lea.vmem %s3, %s164
        %p166 = pneg %p69
        %p167 = pneg %p66
        %p168 = pneg %p90
        %p169 = pneg %p87
        %s170 = smul.u32 32, %s22
        %s171 = smul.u32 2, %s22
        %p172 = scmp.lt.s32.totalorder %s171, 7
        %s173 = scalar_select %p172, %s171, 7
        %s174 = scalar_lea.vmem %s3, %s173
        %s175 = smul.u32 2, %s22
        %p176 = scmp.eq.s32.totalorder %s22, 0
        // Predicated region
        $region33: #{cbow_forward.1} parent=27 // pred_check
          %p177 = pneg %p176
        $region34: #{cbow_forward.1} parent=27 // pred_check_branch
          %179 = sbr.rel (%p177) target = $region36
        $region35: #{cbow_forward.1} parent=27 // pred_region
          %vm180 = vcmask 7168
          %181 = vst.msk [vmem:[#allocation4] sm:$0xff] %vm180, -inf
          %182 = vst.msk [vmem:[#allocation5] sm:$0xff] %vm180, 0.0
          %s183 = sld [smem:[#allocation8]]
          %s184 = sshrl.u32 %s183, 3
          %s185 = sand.u32 %s183, 7
          %s186 = smul.u32 %s184, 16
          %s187 = sadd.s32 %s185, %s186
          %s188 = smul.addr %s187, 16
          %s189 = scalar_lea.hbm %s1, %s188
          %s191 = sshll.u32 [#allocation2], 4
          %s192 = int_to_ptr.vmem [resolvable:$true] %s191
          %194 = dma.hbm_to_vmem [thread:$0]  %s189, 32, %s192, [#allocation6], 128, 128, 1
          %s195 = sld [smem:[#allocation8 + $0x1]]
          %s196 = sshrl.u32 %s195, 3
          %s197 = sand.u32 %s195, 7
          %s198 = smul.u32 %s196, 16
          %s199 = sadd.s32 %s197, %s198
          %s200 = smul.addr %s199, 16
          %s201 = scalar_lea.hbm %s1, %s200
          %s202 = scalar_lea.vmem [#allocation2], 16
          %s204 = sshll.u32 %s202, 4
          %s205 = int_to_ptr.vmem [resolvable:$true] %s204
          %207 = dma.hbm_to_vmem [thread:$0]  %s201, 32, %s205, [#allocation6], 128, 128, 1
          %s208 = sld [smem:[#allocation8 + $0x2]]
          %s209 = sshrl.u32 %s208, 3
          %s210 = sand.u32 %s208, 7
          %s211 = smul.u32 %s209, 16
          %s212 = sadd.s32 %s210, %s211
          %s213 = smul.addr %s212, 16
          %s214 = scalar_lea.hbm %s1, %s213
          %s215 = scalar_lea.vmem [#allocation2], 32
          %s217 = sshll.u32 %s215, 4
          %s218 = int_to_ptr.vmem [resolvable:$true] %s217
          %220 = dma.hbm_to_vmem [thread:$0]  %s214, 32, %s218, [#allocation6], 128, 128, 1
          %s221 = sld [smem:[#allocation8 + $0x3]]
          %s222 = sshrl.u32 %s221, 3
          %s223 = sand.u32 %s221, 7
          %s224 = smul.u32 %s222, 16
          %s225 = sadd.s32 %s223, %s224
          %s226 = smul.addr %s225, 16
          %s227 = scalar_lea.hbm %s1, %s226
          %s228 = scalar_lea.vmem [#allocation2], 48
          %s230 = sshll.u32 %s228, 4
          %s231 = int_to_ptr.vmem [resolvable:$true] %s230
          %233 = dma.hbm_to_vmem [thread:$0]  %s227, 32, %s231, [#allocation6], 128, 128, 1
          %s234 = sld [smem:[#allocation8 + $0x4]]
          %s235 = sshrl.u32 %s234, 3
          %s236 = sand.u32 %s234, 7
          %s237 = smul.u32 %s235, 16
          %s238 = sadd.s32 %s236, %s237
          %s239 = smul.addr %s238, 16
          %s240 = scalar_lea.hbm %s1, %s239
          %s241 = scalar_lea.vmem [#allocation2], 64
          %s243 = sshll.u32 %s241, 4
          %s244 = int_to_ptr.vmem [resolvable:$true] %s243
          %246 = dma.hbm_to_vmem [thread:$0]  %s240, 32, %s244, [#allocation6], 128, 128, 1
          %s247 = sld [smem:[#allocation8 + $0x5]]
          %s248 = sshrl.u32 %s247, 3
          %s249 = sand.u32 %s247, 7
          %s250 = smul.u32 %s248, 16
          %s251 = sadd.s32 %s249, %s250
          %s252 = smul.addr %s251, 16
          %s253 = scalar_lea.hbm %s1, %s252
          %s254 = scalar_lea.vmem [#allocation2], 80
          %s256 = sshll.u32 %s254, 4
          %s257 = int_to_ptr.vmem [resolvable:$true] %s256
          %259 = dma.hbm_to_vmem [thread:$0]  %s253, 32, %s257, [#allocation6], 128, 128, 1
          %s260 = sld [smem:[#allocation8 + $0x80]]
          %s261 = sshrl.u32 %s260, 3
          %s262 = sand.u32 %s260, 7
          %s263 = smul.u32 %s261, 16
          %s264 = sadd.s32 %s262, %s263
          %s265 = smul.addr %s264, 16
          %s266 = scalar_lea.hbm %s1, %s265
          %s267 = scalar_lea.vmem [#allocation2], 1
          %s269 = sshll.u32 %s267, 4
          %s270 = int_to_ptr.vmem [resolvable:$true] %s269
          %272 = dma.hbm_to_vmem [thread:$0]  %s266, 32, %s270, [#allocation6], 128, 128, 1
          %s273 = sld [smem:[#allocation8 + $0x81]]
          %s274 = sshrl.u32 %s273, 3
          %s275 = sand.u32 %s273, 7
          %s276 = smul.u32 %s274, 16
          %s277 = sadd.s32 %s275, %s276
          %s278 = smul.addr %s277, 16
          %s279 = scalar_lea.hbm %s1, %s278
          %s280 = scalar_lea.vmem [#allocation2], 17
          %s282 = sshll.u32 %s280, 4
          %s283 = int_to_ptr.vmem [resolvable:$true] %s282
          %285 = dma.hbm_to_vmem [thread:$0]  %s279, 32, %s283, [#allocation6], 128, 128, 1
          %s286 = sld [smem:[#allocation8 + $0x82]]
          %s287 = sshrl.u32 %s286, 3
          %s288 = sand.u32 %s286, 7
          %s289 = smul.u32 %s287, 16
          %s290 = sadd.s32 %s288, %s289
          %s291 = smul.addr %s290, 16
          %s292 = scalar_lea.hbm %s1, %s291
          %s293 = scalar_lea.vmem [#allocation2], 33
          %s295 = sshll.u32 %s293, 4
          %s296 = int_to_ptr.vmem [resolvable:$true] %s295
          %298 = dma.hbm_to_vmem [thread:$0]  %s292, 32, %s296, [#allocation6], 128, 128, 1
          %s299 = sld [smem:[#allocation8 + $0x83]]
          %s300 = sshrl.u32 %s299, 3
          %s301 = sand.u32 %s299, 7
          %s302 = smul.u32 %s300, 16
          %s303 = sadd.s32 %s301, %s302
          %s304 = smul.addr %s303, 16
          %s305 = scalar_lea.hbm %s1, %s304
          %s306 = scalar_lea.vmem [#allocation2], 49
          %s308 = sshll.u32 %s306, 4
          %s309 = int_to_ptr.vmem [resolvable:$true] %s308
          %311 = dma.hbm_to_vmem [thread:$0]  %s305, 32, %s309, [#allocation6], 128, 128, 1
          %s312 = sld [smem:[#allocation8 + $0x84]]
          %s313 = sshrl.u32 %s312, 3
          %s314 = sand.u32 %s312, 7
          %s315 = smul.u32 %s313, 16
          %s316 = sadd.s32 %s314, %s315
          %s317 = smul.addr %s316, 16
          %s318 = scalar_lea.hbm %s1, %s317
          %s319 = scalar_lea.vmem [#allocation2], 65
          %s321 = sshll.u32 %s319, 4
          %s322 = int_to_ptr.vmem [resolvable:$true] %s321
          %324 = dma.hbm_to_vmem [thread:$0]  %s318, 32, %s322, [#allocation6], 128, 128, 1
          %s325 = sld [smem:[#allocation8 + $0x85]]
          %s326 = sshrl.u32 %s325, 3
          %s327 = sand.u32 %s325, 7
          %s328 = smul.u32 %s326, 16
          %s329 = sadd.s32 %s327, %s328
          %s330 = smul.addr %s329, 16
          %s331 = scalar_lea.hbm %s1, %s330
          %s332 = scalar_lea.vmem [#allocation2], 81
          %s334 = sshll.u32 %s332, 4
          %s335 = int_to_ptr.vmem [resolvable:$true] %s334
          %337 = dma.hbm_to_vmem [thread:$0]  %s331, 32, %s335, [#allocation6], 128, 128, 1
          %s338 = sld [smem:[#allocation8 + $0x100]]
          %s339 = sshrl.u32 %s338, 3
          %s340 = sand.u32 %s338, 7
          %s341 = smul.u32 %s339, 16
          %s342 = sadd.s32 %s340, %s341
          %s343 = smul.addr %s342, 16
          %s344 = scalar_lea.hbm %s1, %s343
          %s345 = scalar_lea.vmem [#allocation2], 2
          %s347 = sshll.u32 %s345, 4
          %s348 = int_to_ptr.vmem [resolvable:$true] %s347
          %350 = dma.hbm_to_vmem [thread:$0]  %s344, 32, %s348, [#allocation6], 128, 128, 1
          %s351 = sld [smem:[#allocation8 + $0x101]]
          %s352 = sshrl.u32 %s351, 3
          %s353 = sand.u32 %s351, 7
          %s354 = smul.u32 %s352, 16
          %s355 = sadd.s32 %s353, %s354
          %s356 = smul.addr %s355, 16
          %s357 = scalar_lea.hbm %s1, %s356
          %s358 = scalar_lea.vmem [#allocation2], 18
          %s360 = sshll.u32 %s358, 4
          %s361 = int_to_ptr.vmem [resolvable:$true] %s360
          %363 = dma.hbm_to_vmem [thread:$0]  %s357, 32, %s361, [#allocation6], 128, 128, 1
          %s364 = sld [smem:[#allocation8 + $0x102]]
          %s365 = sshrl.u32 %s364, 3
          %s366 = sand.u32 %s364, 7
          %s367 = smul.u32 %s365, 16
          %s368 = sadd.s32 %s366, %s367
          %s369 = smul.addr %s368, 16
          %s370 = scalar_lea.hbm %s1, %s369
          %s371 = scalar_lea.vmem [#allocation2], 34
          %s373 = sshll.u32 %s371, 4
          %s374 = int_to_ptr.vmem [resolvable:$true] %s373
          %376 = dma.hbm_to_vmem [thread:$0]  %s370, 32, %s374, [#allocation6], 128, 128, 1
          %s377 = sld [smem:[#allocation8 + $0x103]]
          %s378 = sshrl.u32 %s377, 3
          %s379 = sand.u32 %s377, 7
          %s380 = smul.u32 %s378, 16
          %s381 = sadd.s32 %s379, %s380
          %s382 = smul.addr %s381, 16
          %s383 = scalar_lea.hbm %s1, %s382
          %s384 = scalar_lea.vmem [#allocation2], 50
          %s386 = sshll.u32 %s384, 4
          %s387 = int_to_ptr.vmem [resolvable:$true] %s386
          %389 = dma.hbm_to_vmem [thread:$0]  %s383, 32, %s387, [#allocation6], 128, 128, 1
          %s390 = sld [smem:[#allocation8 + $0x104]]
          %s391 = sshrl.u32 %s390, 3
          %s392 = sand.u32 %s390, 7
          %s393 = smul.u32 %s391, 16
          %s394 = sadd.s32 %s392, %s393
          %s395 = smul.addr %s394, 16
          %s396 = scalar_lea.hbm %s1, %s395
          %s397 = scalar_lea.vmem [#allocation2], 66
          %s399 = sshll.u32 %s397, 4
          %s400 = int_to_ptr.vmem [resolvable:$true] %s399
          %402 = dma.hbm_to_vmem [thread:$0]  %s396, 32, %s400, [#allocation6], 128, 128, 1
          %s403 = sld [smem:[#allocation8 + $0x105]]
          %s404 = sshrl.u32 %s403, 3
          %s405 = sand.u32 %s403, 7
          %s406 = smul.u32 %s404, 16
          %s407 = sadd.s32 %s405, %s406
          %s408 = smul.addr %s407, 16
          %s409 = scalar_lea.hbm %s1, %s408
          %s410 = scalar_lea.vmem [#allocation2], 82
          %s412 = sshll.u32 %s410, 4
          %s413 = int_to_ptr.vmem [resolvable:$true] %s412
          %415 = dma.hbm_to_vmem [thread:$0]  %s409, 32, %s413, [#allocation6], 128, 128, 1
          %s416 = sld [smem:[#allocation8 + $0x180]]
          %s417 = sshrl.u32 %s416, 3
          %s418 = sand.u32 %s416, 7
          %s419 = smul.u32 %s417, 16
          %s420 = sadd.s32 %s418, %s419
          %s421 = smul.addr %s420, 16
          %s422 = scalar_lea.hbm %s1, %s421
          %s423 = scalar_lea.vmem [#allocation2], 3
          %s425 = sshll.u32 %s423, 4
          %s426 = int_to_ptr.vmem [resolvable:$true] %s425
          %428 = dma.hbm_to_vmem [thread:$0]  %s422, 32, %s426, [#allocation6], 128, 128, 1
          %s429 = sld [smem:[#allocation8 + $0x181]]
          %s430 = sshrl.u32 %s429, 3
          %s431 = sand.u32 %s429, 7
          %s432 = smul.u32 %s430, 16
          %s433 = sadd.s32 %s431, %s432
          %s434 = smul.addr %s433, 16
          %s435 = scalar_lea.hbm %s1, %s434
          %s436 = scalar_lea.vmem [#allocation2], 19
          %s438 = sshll.u32 %s436, 4
          %s439 = int_to_ptr.vmem [resolvable:$true] %s438
          %441 = dma.hbm_to_vmem [thread:$0]  %s435, 32, %s439, [#allocation6], 128, 128, 1
          %s442 = sld [smem:[#allocation8 + $0x182]]
          %s443 = sshrl.u32 %s442, 3
          %s444 = sand.u32 %s442, 7
          %s445 = smul.u32 %s443, 16
          %s446 = sadd.s32 %s444, %s445
          %s447 = smul.addr %s446, 16
          %s448 = scalar_lea.hbm %s1, %s447
          %s449 = scalar_lea.vmem [#allocation2], 35
          %s451 = sshll.u32 %s449, 4
          %s452 = int_to_ptr.vmem [resolvable:$true] %s451
          %454 = dma.hbm_to_vmem [thread:$0]  %s448, 32, %s452, [#allocation6], 128, 128, 1
          %s455 = sld [smem:[#allocation8 + $0x183]]
          %s456 = sshrl.u32 %s455, 3
          %s457 = sand.u32 %s455, 7
          %s458 = smul.u32 %s456, 16
          %s459 = sadd.s32 %s457, %s458
          %s460 = smul.addr %s459, 16
          %s461 = scalar_lea.hbm %s1, %s460
          %s462 = scalar_lea.vmem [#allocation2], 51
          %s464 = sshll.u32 %s462, 4
          %s465 = int_to_ptr.vmem [resolvable:$true] %s464
          %467 = dma.hbm_to_vmem [thread:$0]  %s461, 32, %s465, [#allocation6], 128, 128, 1
          %s468 = sld [smem:[#allocation8 + $0x184]]
          %s469 = sshrl.u32 %s468, 3
          %s470 = sand.u32 %s468, 7
          %s471 = smul.u32 %s469, 16
          %s472 = sadd.s32 %s470, %s471
          %s473 = smul.addr %s472, 16
          %s474 = scalar_lea.hbm %s1, %s473
          %s475 = scalar_lea.vmem [#allocation2], 67
          %s477 = sshll.u32 %s475, 4
          %s478 = int_to_ptr.vmem [resolvable:$true] %s477
          %480 = dma.hbm_to_vmem [thread:$0]  %s474, 32, %s478, [#allocation6], 128, 128, 1
          %s481 = sld [smem:[#allocation8 + $0x185]]
          %s482 = sshrl.u32 %s481, 3
          %s483 = sand.u32 %s481, 7
          %s484 = smul.u32 %s482, 16
          %s485 = sadd.s32 %s483, %s484
          %s486 = smul.addr %s485, 16
          %s487 = scalar_lea.hbm %s1, %s486
          %s488 = scalar_lea.vmem [#allocation2], 83
          %s490 = sshll.u32 %s488, 4
          %s491 = int_to_ptr.vmem [resolvable:$true] %s490
          %493 = dma.hbm_to_vmem [thread:$0]  %s487, 32, %s491, [#allocation6], 128, 128, 1
          %s494 = smul.u32 1, 2
          %s495 = sshll.u32 %s494, 4
          %496 = dma.done [#allocation6], %s495
          %s497 = sshll.u32 %s494, 4
          %498 = dma.done [#allocation6], %s497
          %s499 = sshll.u32 %s494, 4
          %500 = dma.done [#allocation6], %s499
          %s501 = sshll.u32 %s494, 4
          %502 = dma.done [#allocation6], %s501
          %s503 = sshll.u32 %s494, 4
          %504 = dma.done [#allocation6], %s503
          %s505 = sshll.u32 %s494, 4
          %506 = dma.done [#allocation6], %s505
          %s507 = sshll.u32 %s494, 4
          %508 = dma.done [#allocation6], %s507
          %s509 = sshll.u32 %s494, 4
          %510 = dma.done [#allocation6], %s509
          %s511 = sshll.u32 %s494, 4
          %512 = dma.done [#allocation6], %s511
          %s513 = sshll.u32 %s494, 4
          %514 = dma.done [#allocation6], %s513
          %s515 = sshll.u32 %s494, 4
          %516 = dma.done [#allocation6], %s515
          %s517 = sshll.u32 %s494, 4
          %518 = dma.done [#allocation6], %s517
          %s519 = sshll.u32 %s494, 4
          %520 = dma.done [#allocation6], %s519
          %s521 = sshll.u32 %s494, 4
          %522 = dma.done [#allocation6], %s521
          %s523 = sshll.u32 %s494, 4
          %524 = dma.done [#allocation6], %s523
          %s525 = sshll.u32 %s494, 4
          %526 = dma.done [#allocation6], %s525
          %s527 = sshll.u32 %s494, 4
          %528 = dma.done [#allocation6], %s527
          %s529 = sshll.u32 %s494, 4
          %530 = dma.done [#allocation6], %s529
          %s531 = sshll.u32 %s494, 4
          %532 = dma.done [#allocation6], %s531
          %s533 = sshll.u32 %s494, 4
          %534 = dma.done [#allocation6], %s533
          %s535 = sshll.u32 %s494, 4
          %536 = dma.done [#allocation6], %s535
          %s537 = sshll.u32 %s494, 4
          %538 = dma.done [#allocation6], %s537
          %s539 = sshll.u32 %s494, 4
          %540 = dma.done [#allocation6], %s539
          %s541 = sshll.u32 %s494, 4
          %542 = dma.done [#allocation6], %s541
          %543 = vst [vmem:[#allocation2] sm:$0xf0] 0.0
          %544 = vst [vmem:[#allocation2 + $0x8] sm:$0xf0] 0.0
          %545 = vst [vmem:[#allocation2 + $0x10] sm:$0xf0] 0.0
          %546 = vst [vmem:[#allocation2 + $0x18] sm:$0xf0] 0.0
          %547 = vst [vmem:[#allocation2 + $0x20] sm:$0xf0] 0.0
          %548 = vst [vmem:[#allocation2 + $0x28] sm:$0xf0] 0.0
          %549 = vst [vmem:[#allocation2 + $0x30] sm:$0xf0] 0.0
          %550 = vst [vmem:[#allocation2 + $0x38] sm:$0xf0] 0.0
          %551 = vst [vmem:[#allocation2 + $0x40] sm:$0xf0] 0.0
          %552 = vst [vmem:[#allocation2 + $0x48] sm:$0xf0] 0.0
          %553 = vst [vmem:[#allocation2 + $0x50] sm:$0xf0] 0.0
          %554 = vst [vmem:[#allocation2 + $0x58] sm:$0xf0] 0.0
          %v555 = vld [vmem:[#allocation2] sm:$0xff]
          %v556 = vld [vmem:[#allocation2 + $0x8] sm:$0xff]
          %v557 = vld [vmem:[#allocation2 + $0x10] sm:$0xff]
          %v558 = vld [vmem:[#allocation2 + $0x18] sm:$0xff]
          %v559 = vld [vmem:[#allocation2 + $0x20] sm:$0xff]
          %v560 = vld [vmem:[#allocation2 + $0x28] sm:$0xff]
          %v561 = vld [vmem:[#allocation2 + $0x30] sm:$0xff]
          %v562 = vld [vmem:[#allocation2 + $0x38] sm:$0xff]
          %v563 = vld [vmem:[#allocation2 + $0x40] sm:$0xff]
          %v564 = vld [vmem:[#allocation2 + $0x48] sm:$0xff]
          %v565 = vld [vmem:[#allocation2 + $0x50] sm:$0xff]
          %v566 = vld [vmem:[#allocation2 + $0x58] sm:$0xff]
          %v567 = vadd.f32 %v555, %v557
          %v568 = vadd.f32 %v567, %v559
          %v569 = vadd.f32 %v568, %v561
          %v570 = vadd.f32 %v569, %v563
          %v571 = vadd.f32 %v570, %v565
          %v572 = vadd.f32 %v556, %v558
          %v573 = vadd.f32 %v572, %v560
          %v574 = vadd.f32 %v573, %v562
          %v575 = vadd.f32 %v574, %v564
          %v576 = vadd.f32 %v575, %v566
          %v577 = vpack.c.bf16 %v571, %v571
          %v578 = vpack.c.bf16 %v576, %v576
          %v581 = vunpack.c.l.b16 %v577
          %v582 = vunpack.c.l.b16 %v578
          %v583 = vpack.c.b16 %v582, %v581
          %585 = vst [vmem:[#allocation3] sm:$0xff] %v583
        $region36: #{cbow_forward.1} parent=27 // pred_fallthru
          _
        %v586 = vld [vmem:[#allocation3] sm:$0xff]
        %v587 = vld [vmem:[%s150] sm:$0xff]
        %v588 = vld [vmem:[%s150 + $0x8] sm:$0xff]
        %v589 = vld [vmem:[%s150 + $0x10] sm:$0xff]
        %v590 = vld [vmem:[%s150 + $0x18] sm:$0xff]
        %v591 = vld [vmem:[%s150 + $0x20] sm:$0xff]
        %v592 = vld [vmem:[%s150 + $0x28] sm:$0xff]
        %v593 = vld [vmem:[%s150 + $0x30] sm:$0xff]
        %v594 = vld [vmem:[%s150 + $0x38] sm:$0xff]
        %v595 = vld [vmem:[%s150 + $0x40] sm:$0xff]
        %v596 = vld [vmem:[%s150 + $0x48] sm:$0xff]
        %v597 = vld [vmem:[%s150 + $0x50] sm:$0xff]
        %v598 = vld [vmem:[%s150 + $0x58] sm:$0xff]
        %v599 = vld [vmem:[%s150 + $0x60] sm:$0xff]
        %v600 = vld [vmem:[%s150 + $0x68] sm:$0xff]
        %v601 = vld [vmem:[%s150 + $0x70] sm:$0xff]
        %v602 = vld [vmem:[%s150 + $0x78] sm:$0xff]
        %v603 = vld [vmem:[%s150 + $0x80] sm:$0xff]
        %v604 = vld [vmem:[%s150 + $0x88] sm:$0xff]
        %v605 = vld [vmem:[%s150 + $0x90] sm:$0xff]
        %v606 = vld [vmem:[%s150 + $0x98] sm:$0xff]
        %v607 = vld [vmem:[%s150 + $0xa0] sm:$0xff]
        %v608 = vld [vmem:[%s150 + $0xa8] sm:$0xff]
        %v609 = vld [vmem:[%s150 + $0xb0] sm:$0xff]
        %v610 = vld [vmem:[%s150 + $0xb8] sm:$0xff]
        %v611 = vld [vmem:[%s150 + $0xc0] sm:$0xff]
        %v612 = vld [vmem:[%s150 + $0xc8] sm:$0xff]
        %v613 = vld [vmem:[%s150 + $0xd0] sm:$0xff]
        %v614 = vld [vmem:[%s150 + $0xd8] sm:$0xff]
        %v615 = vld [vmem:[%s150 + $0xe0] sm:$0xff]
        %v616 = vld [vmem:[%s150 + $0xe8] sm:$0xff]
        %v617 = vld [vmem:[%s150 + $0xf0] sm:$0xff]
        %v618 = vld [vmem:[%s150 + $0xf8] sm:$0xff]
        %v619 = vld [vmem:[%s174] sm:$0x3]
        %v621 = vlaneseq
        %v622 = vshrl.u32 %v621, 7
        %v623 = vsub.s32 0, %v622
        %v624 = vrot.slane %v619, %v623
        %v625 = vlaneseq
        %v626 = vshrl.u32 %v625, 7
        %v627 = vsub.s32 1, %v626
        %v628 = vrot.slane %v619, %v627
        %v632 = vunpack.c.l.b16 %v586
        %v633 = vunpack.c.h.b16 %v586
        %v634 = vpack.c.b16 %v632, %v632
        %v635 = vpack.c.b16 %v633, %v633
        %v670 = vunpack.c.l.b16 %v587
        %v671 = vunpack.c.h.b16 %v587
        %v672 = vunpack.c.l.b16 %v588
        %v673 = vunpack.c.h.b16 %v588
        %v674 = vunpack.c.l.b16 %v589
        %v675 = vunpack.c.h.b16 %v589
        %v676 = vunpack.c.l.b16 %v590
        %v677 = vunpack.c.h.b16 %v590
        %v678 = vunpack.c.l.b16 %v591
        %v679 = vunpack.c.h.b16 %v591
        %v680 = vunpack.c.l.b16 %v592
        %v681 = vunpack.c.h.b16 %v592
        %v682 = vunpack.c.l.b16 %v593
        %v683 = vunpack.c.h.b16 %v593
        %v684 = vunpack.c.l.b16 %v594
        %v685 = vunpack.c.h.b16 %v594
        %v686 = vunpack.c.l.b16 %v595
        %v687 = vunpack.c.h.b16 %v595
        %v688 = vunpack.c.l.b16 %v596
        %v689 = vunpack.c.h.b16 %v596
        %v690 = vunpack.c.l.b16 %v597
        %v691 = vunpack.c.h.b16 %v597
        %v692 = vunpack.c.l.b16 %v598
        %v693 = vunpack.c.h.b16 %v598
        %v694 = vunpack.c.l.b16 %v599
        %v695 = vunpack.c.h.b16 %v599
        %v696 = vunpack.c.l.b16 %v600
        %v697 = vunpack.c.h.b16 %v600
        %v698 = vunpack.c.l.b16 %v601
        %v699 = vunpack.c.h.b16 %v601
        %v700 = vunpack.c.l.b16 %v602
        %v701 = vunpack.c.h.b16 %v602
        %v702 = vunpack.c.l.b16 %v603
        %v703 = vunpack.c.h.b16 %v603
        %v704 = vunpack.c.l.b16 %v604
        %v705 = vunpack.c.h.b16 %v604
        %v706 = vunpack.c.l.b16 %v605
        %v707 = vunpack.c.h.b16 %v605
        %v708 = vunpack.c.l.b16 %v606
        %v709 = vunpack.c.h.b16 %v606
        %v710 = vunpack.c.l.b16 %v607
        %v711 = vunpack.c.h.b16 %v607
        %v712 = vunpack.c.l.b16 %v608
        %v713 = vunpack.c.h.b16 %v608
        %v714 = vunpack.c.l.b16 %v609
        %v715 = vunpack.c.h.b16 %v609
        %v716 = vunpack.c.l.b16 %v610
        %v717 = vunpack.c.h.b16 %v610
        %v718 = vunpack.c.l.b16 %v611
        %v719 = vunpack.c.h.b16 %v611
        %v720 = vunpack.c.l.b16 %v612
        %v721 = vunpack.c.h.b16 %v612
        %v722 = vunpack.c.l.b16 %v613
        %v723 = vunpack.c.h.b16 %v613
        %v724 = vunpack.c.l.b16 %v614
        %v725 = vunpack.c.h.b16 %v614
        %v726 = vunpack.c.l.b16 %v615
        %v727 = vunpack.c.h.b16 %v615
        %v728 = vunpack.c.l.b16 %v616
        %v729 = vunpack.c.h.b16 %v616
        %v730 = vunpack.c.l.b16 %v617
        %v731 = vunpack.c.h.b16 %v617
        %v732 = vunpack.c.l.b16 %v618
        %v733 = vunpack.c.h.b16 %v618
        %v734 = vpack.c.b16 %v672, %v670
        %v735 = vpack.c.b16 %v673, %v671
        %v736 = vpack.c.b16 %v676, %v674
        %v737 = vpack.c.b16 %v677, %v675
        %v738 = vpack.c.b16 %v680, %v678
        %v739 = vpack.c.b16 %v681, %v679
        %v740 = vpack.c.b16 %v684, %v682
        %v741 = vpack.c.b16 %v685, %v683
        %v742 = vpack.c.b16 %v688, %v686
        %v743 = vpack.c.b16 %v689, %v687
        %v744 = vpack.c.b16 %v692, %v690
        %v745 = vpack.c.b16 %v693, %v691
        %v746 = vpack.c.b16 %v696, %v694
        %v747 = vpack.c.b16 %v697, %v695
        %v748 = vpack.c.b16 %v700, %v698
        %v749 = vpack.c.b16 %v701, %v699
        %v750 = vpack.c.b16 %v704, %v702
        %v751 = vpack.c.b16 %v705, %v703
        %v752 = vpack.c.b16 %v708, %v706
        %v753 = vpack.c.b16 %v709, %v707
        %v754 = vpack.c.b16 %v712, %v710
        %v755 = vpack.c.b16 %v713, %v711
        %v756 = vpack.c.b16 %v716, %v714
        %v757 = vpack.c.b16 %v717, %v715
        %v758 = vpack.c.b16 %v720, %v718
        %v759 = vpack.c.b16 %v721, %v719
        %v760 = vpack.c.b16 %v724, %v722
        %v761 = vpack.c.b16 %v725, %v723
        %v762 = vpack.c.b16 %v728, %v726
        %v763 = vpack.c.b16 %v729, %v727
        %v764 = vpack.c.b16 %v732, %v730
        %v765 = vpack.c.b16 %v733, %v731
        %798 = vmatprep.subr.bf16.mxu0 %v735
        %799 = vmatpush1.bf16.xpose.msra.mxu0 %v734
        %800 = vmatprep.subr.bf16.mxu0 %v737
        %801 = vmatpush1.bf16.xpose.msra.mxu0 %v736
        %802 = vmatprep.subr.bf16.mxu0 %v739
        %803 = vmatpush1.bf16.xpose.msra.mxu0 %v738
        %804 = vmatprep.subr.bf16.mxu0 %v741
        %805 = vmatpush1.bf16.xpose.msra.mxu0 %v740
        %806 = vmatprep.subr.bf16.mxu0 %v743
        %807 = vmatpush1.bf16.xpose.msra.mxu0 %v742
        %808 = vmatprep.subr.bf16.mxu0 %v745
        %809 = vmatpush1.bf16.xpose.msra.mxu0 %v744
        %810 = vmatprep.subr.bf16.mxu0 %v747
        %811 = vmatpush1.bf16.xpose.msra.mxu0 %v746
        %812 = vmatprep.subr.bf16.mxu0 %v749
        %813 = vmatpush1.bf16.xpose.msra.mxu0 %v748
        %814 = vmatprep.subr.bf16.mxu0 %v751
        %815 = vmatpush1.bf16.xpose.msra.mxu0 %v750
        %816 = vmatprep.subr.bf16.mxu0 %v753
        %817 = vmatpush1.bf16.xpose.msra.mxu0 %v752
        %818 = vmatprep.subr.bf16.mxu0 %v755
        %819 = vmatpush1.bf16.xpose.msra.mxu0 %v754
        %820 = vmatprep.subr.bf16.mxu0 %v757
        %821 = vmatpush1.bf16.xpose.msra.mxu0 %v756
        %822 = vmatprep.subr.bf16.mxu0 %v759
        %823 = vmatpush1.bf16.xpose.msra.mxu0 %v758
        %824 = vmatprep.subr.bf16.mxu0 %v761
        %825 = vmatpush1.bf16.xpose.msra.mxu0 %v760
        %826 = vmatprep.subr.bf16.mxu0 %v763
        %827 = vmatpush1.bf16.xpose.msra.mxu0 %v762
        %828 = vmatprep.subr.bf16.mxu0 %v765
        %829 = vmatpush1.bf16.xpose.msra.mxu0 %v764
        %830 = vmatprep.mubr.bf16.mxu0 %v635
        %831 = vmatmul.mubr.bf16.gmra.mrb[0].mxu0 %v634
        %v832 = vpop.f32.mrb[0].mxu0
        %v833 = vadd.f32 %v624, %v832
        %v834 = vpop.f32.mrb[0].mxu0
        %v835 = vadd.f32 %v628, %v834
        %v836 = vpop.f32.mrb[0].mxu0
        %v837 = vpop.f32.mrb[0].mxu0
        %838 = vdwg.mxu0
        %s839 = smul.u32 %s22, 256
        %s840 = sshra.s32 %s839, 7
        %s841 = sand.u32 %s839, 127
        %s842 = smul.addr %s840, 8
        %s843 = scalar_lea.vmem %s4, %s842
        %844 = vst [vmem:[%s843] sm:$0xff] %v833
        %845 = vst [vmem:[%s843 + $0x8] sm:$0xff] %v835
        %v846 = vld [vmem:[#allocation4] sm:$0xff]
        %v847 = vmax.f32 %v833, %v835
        %848 = vmax.xlane.f32.xlu0 %v847
        %v849 = vpop.xlane.xlu0 %848
        %v850 = vmax.f32 %v846, %v849
        %v851 = vld [vmem:[#allocation5] sm:$0xff]
        %v852 = vsub.f32 %v846, %v850
        %v853 = vmul.f32 %v852, 1.442695
        %v854 = vpow.pop %v853
        %v855 = vmul.f32 %v851, %v854
        %857 = vset.pattern.permute.xlu0 0
        %858 = vperm.xlu0 %857, %v850
        %v859 = vpop.permute.xlu0 %858
        %v861 = vsub.f32 %v833, %v859
        %v862 = vsub.f32 %v835, %v859
        %v863 = vmul.f32 %v861, 1.442695
        %v864 = vpow.pop %v863
        %v865 = vmul.f32 %v862, 1.442695
        %v866 = vpow.pop %v865
        %v867 = vadd.f32 %v864, %v866
        %868 = vadd.xlane.f32.xlu0 %v867
        %v869 = vpop.xlane.xlu0 %868
        %v870 = vadd.f32 %v855, %v869
        %vm871 = vcmask 7168
        %872 = vst.msk [vmem:[#allocation5] sm:$0xff] %vm871, %v870
        %873 = vst.msk [vmem:[#allocation4] sm:$0xff] %vm871, %v850
        %p874 = scmp.eq.s32.totalorder %s22, 3
        // Predicated region
        $region37: #{cbow_forward.1} parent=27 // pred_check
          %p875 = pneg %p874
        $region38: #{cbow_forward.1} parent=27 // pred_check_branch
          %877 = sbr.rel (%p875) target = $region40
        $region39: #{cbow_forward.1} parent=27 // pred_region
          %v878 = vld [vmem:[#allocation4] sm:$0xff]
          %v879 = vld [vmem:[#allocation5] sm:$0xff]
          %v880 = vlog2.pop %v879
          %v881 = vmul.f32 %v880, 0.6931472
          %v882 = vadd.f32 %v878, %v881
          %v883 = vld [vmem:[%s4] sm:$0xff]
          %v884 = vld [vmem:[%s4 + $0x8] sm:$0xff]
          %v885 = vld [vmem:[%s4 + $0x10] sm:$0xff]
          %v886 = vld [vmem:[%s4 + $0x18] sm:$0xff]
          %v887 = vld [vmem:[%s4 + $0x20] sm:$0xff]
          %v888 = vld [vmem:[%s4 + $0x28] sm:$0xff]
          %v889 = vld [vmem:[%s4 + $0x30] sm:$0xff]
          %v890 = vld [vmem:[%s4 + $0x38] sm:$0xff]
          %892 = vset.pattern.permute.xlu0 0
          %893 = vperm.xlu0 %892, %v882
          %v894 = vpop.permute.xlu0 %893
          %v896 = vsub.f32 %v883, %v894
          %v897 = vsub.f32 %v884, %v894
          %v898 = vsub.f32 %v885, %v894
          %v899 = vsub.f32 %v886, %v894
          %v900 = vsub.f32 %v887, %v894
          %v901 = vsub.f32 %v888, %v894
          %v902 = vsub.f32 %v889, %v894
          %v903 = vsub.f32 %v890, %v894
          %904 = vst [vmem:[%s4] sm:$0xff] %v896
          %905 = vst [vmem:[%s4 + $0x8] sm:$0xff] %v897
          %906 = vst [vmem:[%s4 + $0x10] sm:$0xff] %v898
          %907 = vst [vmem:[%s4 + $0x18] sm:$0xff] %v899
          %908 = vst [vmem:[%s4 + $0x20] sm:$0xff] %v900
          %909 = vst [vmem:[%s4 + $0x28] sm:$0xff] %v901
          %910 = vst [vmem:[%s4 + $0x30] sm:$0xff] %v902
          %911 = vst [vmem:[%s4 + $0x38] sm:$0xff] %v903
        $region40: #{cbow_forward.1} parent=27 // pred_fallthru
          _
        // Predicated region
        $region41: #{cbow_forward.1} parent=27 // pred_check
          %p912 = pneg %p87
        $region42: #{cbow_forward.1} parent=27 // pred_check_branch
          %914 = sbr.rel (%p912) target = $region44
        $region43: #{cbow_forward.1} parent=27 // pred_region
          _
        $region44: #{cbow_forward.1} parent=27 // pred_fallthru
          _
        // Predicated region
        $region45: #{cbow_forward.1} parent=27 // pred_check
          %p915 = pneg %p87
        $region46: #{cbow_forward.1} parent=27 // pred_check_branch
          %917 = sbr.rel (%p915) target = $region48
        $region47: #{cbow_forward.1} parent=27 // pred_region
          _
        $region48: #{cbow_forward.1} parent=27 // pred_fallthru
          _
      $region28: #{cbow_forward.1} parent=5 // pred_fallthru
        _
      %p918 = scmp.le.s32.totalorder 2, %s17
      // Predicated region
      $region49: #{cbow_forward.1} parent=5 // pred_check
        %p919 = pneg %p918
      $region50: #{cbow_forward.1} parent=5 // pred_check_branch
        %921 = sbr.rel (%p919) target = $region52
      $region51: #{cbow_forward.1} parent=5 // pred_region
        %s922 = ssub.s32 %s17, 2
      $region52: #{cbow_forward.1} parent=5 // pred_fallthru
        _
    $region6: #{cbow_forward.1} parent=1 // loop_footer
      %s21 = sadd.s32 1, %s17
    $region7: #{cbow_forward.1} parent=1 // loop_footer_branch
      %16 = sbr.rel target = $region3
    $region8: #{cbow_forward.1} parent=1 // loop_exit
      _
    %923 = vsyncpa [#allocation10], 1
    %s924 = scalar_lea.sflag [#allocation10], 1
    %925 = vsyncpa %s924, 1
  %926 = vsyncmov [#allocation6]
  %s927 = vpop.sfrf %926
  %p928 = scmp.eq.s32.totalorder %s927, 0
  %p929 = pneg %p928
  %931 = shalt.err (%p929)

</llo_original>
